<compile_context>
chip_gen: v7x
topology: tpu7x:2x2x1
jax: 0.10.0
libtpu: 0.0.40
codegen_flags: <defaults>
</compile_context>

<pallas_src>
import math
import functools

import jax
import jax.numpy as jnp
from jax.experimental import pallas as pl
from jax.experimental.pallas import tpu as pltpu


def _attention_kernel(x_ref, gamma_ref, beta_ref, wqkv_ref, o_ref, *, num_head: int, eps: float):
    bb, T, D = x_ref.shape
    H = num_head
    dh = D // H
    N = bb * T

    # ---- LayerNorm over the last dim, math in f32 (nn.LayerNorm defaults, eps=1e-5) ----
    x = x_ref[...].reshape(N, D).astype(jnp.float32)              # fold batch block into rows
    mean = jnp.mean(x, axis=-1, keepdims=True)
    xc = x - mean
    var = jnp.mean(xc * xc, axis=-1, keepdims=True)
    xn = xc * jax.lax.rsqrt(var + eps)
    xn = xn * gamma_ref[...].astype(jnp.float32) + beta_ref[...].astype(jnp.float32)  # (N, D)

    # ---- Fused Q/K/V projection: one (N, D) x (D, 3D) MXU matmul, f32 accumulate. ----
    # Weight is pre-transposed host-side (no in-kernel .T) and the 1/sqrt(dh) scale is already
    # folded into the Q columns. Operands stay in the compute dtype (bf16 on v6e/v7x for peak).
    w = wqkv_ref[...]                                             # (D, 3D)
    cdt = w.dtype
    qkv = jnp.dot(xn.astype(cdt), w, preferred_element_type=jnp.float32)   # (N, 3D) f32

    q = qkv[:, 0:D].astype(cdt).reshape(bb, T, D)
    k = qkv[:, D:2 * D].astype(cdt).reshape(bb, T, D)
    v = qkv[:, 2 * D:3 * D].astype(cdt).reshape(bb, T, D)

    # ---- Split heads into a batch axis so attention runs as one batched einsum per stage
    #      (instead of H separate K=dh/N=dh matmuls). Batch index n = h*bb + b.
    def to_heads(t):                                              # (bb, T, D) -> (H*bb, T, dh)
        return jnp.stack(
            [t[:, :, h * dh:(h + 1) * dh] for h in range(H)], axis=0
        ).reshape(H * bb, T, dh)

    qh, kh, vh = to_heads(q), to_heads(k), to_heads(v)

    # scores already carry the 1/sqrt(dh) factor (folded into Wq host-side)
    scores = jnp.einsum('nqd,nkd->nqk', qh, kh,
                        preferred_element_type=jnp.float32)        # (H*bb, T, T) f32
    m = jnp.max(scores, axis=-1, keepdims=True)
    e = jnp.exp(scores - m)
    denom = jnp.sum(e, axis=-1, keepdims=True)
    p = e * pl.reciprocal(denom, approx=True)                      # divide -> EUP slot
    # nn.Dropout on attention weights: identity in eval mode.

    out_h = jnp.einsum('nqk,nkd->nqd', p.astype(cdt), vh,
                       preferred_element_type=jnp.float32)         # (H*bb, T, dh) f32

    # ---- Reassemble heads along the lane dim and do a single lane-dense store. ----
    out = jnp.concatenate([out_h[h * bb:(h + 1) * bb] for h in range(H)], axis=-1)  # (bb, T, D)
    o_ref[...] = out.astype(o_ref.dtype)


def _default_b_block(B, T, D, num_head, budget_bytes=8 * 1024 * 1024):
    """Largest divisor of B whose per-step f32 working set fits a conservative VMEM budget
    (amortizes per-grid-step overhead without risking pressure on v7x's 64 MiB VMEM)."""
    def step_bytes(bb):
        rows = bb * T
        ln_qkv = rows * D * 4 * 3 + rows * 3 * D * 4 * 2   # x/xn copies + qkv (+ cast copy)
        attn = num_head * bb * T * T * 4 * 3               # scores / exp / probs
        out = rows * D * 4 * 2
        return ln_qkv + attn + out

    best = 1
    for bb in range(1, B + 1):
        if B % bb == 0 and step_bytes(bb) <= budget_bytes:
            best = bb
    return best


def temporal_self_attention(x, gamma, beta, wq, wk, wv, *, num_head, eps=1e-5,
                            matmul_dtype=None, b_block=None):
    """Forward pass of TemporalSelfAttention (eval mode).

    x: (B, T, D); wq/wk/wv follow nn.Linear convention (D_out, D_in), y = x @ W.T, bias=False.
    matmul_dtype: dtype for MXU operands (pass jnp.bfloat16 on v6e/v7x for peak throughput);
                  LayerNorm/softmax statistics are always computed in f32.
    """
    B, T, D = x.shape
    assert D % num_head == 0
    dh = D // num_head

    cdt = jnp.dtype(matmul_dtype) if matmul_dtype is not None else x.dtype
    scale = 1.0 / math.sqrt(dh)
    # Fused, pre-transposed QKV weight (host-side, done once); 1/sqrt(dh) folded into Q block.
    w_qkv = jnp.concatenate([wq.T * scale, wk.T, wv.T], axis=1).astype(cdt)   # (D, 3D)

    if b_block is None:
        b_block = _default_b_block(B, T, D, num_head)
    assert B % b_block == 0, "b_block must divide B"

    kernel = functools.partial(_attention_kernel, num_head=num_head, eps=eps)

    grid_spec = pltpu.PrefetchScalarGridSpec(
        num_scalar_prefetch=0,
        grid=(B // b_block,),
        in_specs=[
            pl.BlockSpec((b_block, T, D), lambda b: (b, 0, 0)),   # x
            pl.BlockSpec((1, D), lambda b: (0, 0)),               # gamma
            pl.BlockSpec((1, D), lambda b: (0, 0)),               # beta
            pl.BlockSpec((D, 3 * D), lambda b: (0, 0)),           # fused W_qkv (constant index)
        ],
        out_specs=pl.BlockSpec((b_block, T, D), lambda b: (b, 0, 0)),
    )

    return pl.pallas_call(
        kernel,
        out_shape=jax.ShapeDtypeStruct((B, T, D), x.dtype),
        grid_spec=grid_spec,
        compiler_params=pltpu.CompilerParams(
            dimension_semantics=("parallel",),
            vmem_limit_bytes=32 * 1024 * 1024,   # safe on v5e/v6e/v7x; kernel uses far less
        ),
    )(x, gamma.reshape(1, D), beta.reshape(1, D), w_qkv)


def _reference(x, gamma, beta, wq, wk, wv, *, num_head, eps=1e-5):
    """Pure-JAX reference mirroring the PyTorch forward (eval mode)."""
    B, T, D = x.shape
    H = num_head
    dh = D // H
    mean = jnp.mean(x, axis=-1, keepdims=True)
    var = jnp.mean((x - mean) ** 2, axis=-1, keepdims=True)
    xn = (x - mean) / jnp.sqrt(var + eps) * gamma + beta
    q = (xn @ wq.T).reshape(B, T, H, dh).transpose(0, 2, 1, 3)
    k = (xn @ wk.T).reshape(B, T, H, dh).transpose(0, 2, 1, 3)
    v = (xn @ wv.T).reshape(B, T, H, dh).transpose(0, 2, 1, 3)
    scores = jnp.einsum("bhqd,bhkd->bhqk", q, k) / math.sqrt(dh)
    attn = jax.nn.softmax(scores, axis=-1)
    out = jnp.einsum("bhqk,bhkd->bhqd", attn, v)
    return out.transpose(0, 2, 1, 3).reshape(B, T, D)


if __name__ == "__main__":
    B, T, D, H = 2, 8, 32, 4   # latent_dim=32, num_head=4, seq=8, batch=2

    key = jax.random.PRNGKey(0)
    kx, kq, kk, kv, kg, kb = jax.random.split(key, 6)

    x = jax.random.normal(kx, (B, T, D), dtype=jnp.float32)
    # Deterministic synthetic parameters (non-trivial LayerNorm affine to exercise it).
    gamma = 1.0 + 0.1 * jax.random.normal(kg, (D,), dtype=jnp.float32)
    beta = 0.05 * jax.random.normal(kb, (D,), dtype=jnp.float32)
    bound = 1.0 / math.sqrt(D)
    wq = jax.random.uniform(kq, (D, D), minval=-bound, maxval=bound, dtype=jnp.float32)
    wk = jax.random.uniform(kk, (D, D), minval=-bound, maxval=bound, dtype=jnp.float32)
    wv = jax.random.uniform(kv, (D, D), minval=-bound, maxval=bound, dtype=jnp.float32)

    ref = _reference(x, gamma, beta, wq, wk, wv, num_head=H)

    # f32-operand run (tolerance covers the EUP approximate reciprocal in the softmax).
    out = temporal_self_attention(x, gamma, beta, wq, wk, wv, num_head=H)
    out = jax.block_until_ready(out)
    assert out.shape == (B, T, D)
    assert jnp.allclose(out, ref, atol=2e-3, rtol=2e-3), "f32 kernel mismatch vs reference"

    # bf16-operand run (the v6e/v7x MXU-peak configuration); stats stay f32, so only
    # operand-rounding error vs the f32 reference is expected.
    out_bf16 = temporal_self_attention(x, gamma, beta, wq, wk, wv, num_head=H,
                                       matmul_dtype=jnp.bfloat16)
    out_bf16 = jax.block_until_ready(out_bf16)
    assert jnp.allclose(out_bf16, ref, atol=5e-2, rtol=5e-2), "bf16 kernel mismatch vs reference"

    print("KERNEL_OK")
</pallas_src>

<mosaic_0001>
module attributes {stable_mosaic.version = 11 : i64} {
  func.func @_attention_kernel(%arg0: i32, %arg1: memref<2x8x32xf32, #tpu.memory_space<vmem>>, %arg2: memref<1x32xf32, #tpu.memory_space<vmem>>, %arg3: memref<1x32xf32, #tpu.memory_space<vmem>>, %arg4: memref<32x96xf32, #tpu.memory_space<vmem>>, %arg5: memref<2x8x32xf32, #tpu.memory_space<vmem>>) attributes {dimension_semantics = [#tpu.dimension_semantics<parallel>], iteration_bounds = array<i64: 1>, scalar_prefetch = 0 : i64, scratch_operands = 0 : i64, tpu.core_type = #tpu.core_type<tc>, window_params = [{transform_indices = @transform_0, window_bounds = array<i64: 2, 8, 32>}, {pipeline_mode = #tpu.pipeline_mode<synchronous>, transform_indices = @transform_1, window_bounds = array<i64: 1, 32>}, {pipeline_mode = #tpu.pipeline_mode<synchronous>, transform_indices = @transform_2, window_bounds = array<i64: 1, 32>}, {pipeline_mode = #tpu.pipeline_mode<synchronous>, transform_indices = @transform_3, window_bounds = array<i64: 32, 96>}, {transform_indices = @transform_4, window_bounds = array<i64: 2, 8, 32>}]} {
    %c0 = arith.constant 0 : index
    %c0_0 = arith.constant 0 : index
    %c0_1 = arith.constant 0 : index
    %0 = vector.load %arg1[%c0, %c0_0, %c0_1] : memref<2x8x32xf32, #tpu.memory_space<vmem>>, vector<2x8x32xf32>
    %1 = vector.shape_cast %0 : vector<2x8x32xf32> to vector<16x32xf32>
    %cst = arith.constant dense<0.000000e+00> : vector<16xf32>
    %2 = vector.multi_reduction <add>, %1, %cst [1] : vector<16x32xf32> to vector<16xf32>
    %3 = vector.shape_cast %2 : vector<16xf32> to vector<16x1xf32>
    %cst_2 = arith.constant 3.200000e+01 : f32
    %4 = vector.broadcast %cst_2 : f32 to vector<16x1xf32>
    %5 = arith.divf %3, %4 : vector<16x1xf32>
    %6 = vector.broadcast %5 : vector<16x1xf32> to vector<16x32xf32>
    %7 = arith.subf %1, %6 : vector<16x32xf32>
    %8 = arith.mulf %7, %7 : vector<16x32xf32>
    %cst_3 = arith.constant dense<0.000000e+00> : vector<16xf32>
    %9 = vector.multi_reduction <add>, %8, %cst_3 [1] : vector<16x32xf32> to vector<16xf32>
    %10 = vector.shape_cast %9 : vector<16xf32> to vector<16x1xf32>
    %cst_4 = arith.constant 3.200000e+01 : f32
    %11 = vector.broadcast %cst_4 : f32 to vector<16x1xf32>
    %12 = arith.divf %10, %11 : vector<16x1xf32>
    %cst_5 = arith.constant 9.99999974E-6 : f32
    %13 = vector.broadcast %cst_5 : f32 to vector<16x1xf32>
    %14 = arith.addf %12, %13 : vector<16x1xf32>
    %15 = math.rsqrt %14 : vector<16x1xf32>
    %16 = vector.broadcast %15 : vector<16x1xf32> to vector<16x32xf32>
    %17 = arith.mulf %7, %16 : vector<16x32xf32>
    %c0_6 = arith.constant 0 : index
    %c0_7 = arith.constant 0 : index
    %18 = vector.load %arg2[%c0_6, %c0_7] : memref<1x32xf32, #tpu.memory_space<vmem>>, vector<1x32xf32>
    %19 = vector.broadcast %18 : vector<1x32xf32> to vector<16x32xf32>
    %20 = arith.mulf %17, %19 : vector<16x32xf32>
    %c0_8 = arith.constant 0 : index
    %c0_9 = arith.constant 0 : index
    %21 = vector.load %arg3[%c0_8, %c0_9] : memref<1x32xf32, #tpu.memory_space<vmem>>, vector<1x32xf32>
    %22 = vector.broadcast %21 : vector<1x32xf32> to vector<16x32xf32>
    %23 = arith.addf %20, %22 : vector<16x32xf32>
    %c0_10 = arith.constant 0 : index
    %c0_11 = arith.constant 0 : index
    %24 = vector.load %arg4[%c0_10, %c0_11] : memref<32x96xf32, #tpu.memory_space<vmem>>, vector<32x96xf32>
    %cst_12 = arith.constant dense<0.000000e+00> : vector<16x96xf32>
    %25 = tpu.matmul %23, %24, %cst_12 {dimension_numbers = #tpu.dot_dimension_numbers<[1], [0], [0], [1], [0, 0, 1, 1], [], []>} : vector<16x32xf32>, vector<32x96xf32>, vector<16x96xf32> -> vector<16x96xf32>
    %26 = vector.extract_strided_slice %25 {offsets = [0, 0], sizes = [16, 32], strides = [1, 1]} : vector<16x96xf32> to vector<16x32xf32>
    %27 = vector.shape_cast %26 : vector<16x32xf32> to vector<2x8x32xf32>
    %28 = vector.extract_strided_slice %25 {offsets = [0, 32], sizes = [16, 32], strides = [1, 1]} : vector<16x96xf32> to vector<16x32xf32>
    %29 = vector.shape_cast %28 : vector<16x32xf32> to vector<2x8x32xf32>
    %30 = vector.extract_strided_slice %25 {offsets = [0, 64], sizes = [16, 32], strides = [1, 1]} : vector<16x96xf32> to vector<16x32xf32>
    %31 = vector.shape_cast %30 : vector<16x32xf32> to vector<2x8x32xf32>
    %32 = vector.extract_strided_slice %27 {offsets = [0, 0, 0], sizes = [2, 8, 8], strides = [1, 1, 1]} : vector<2x8x32xf32> to vector<2x8x8xf32>
    %33 = vector.extract_strided_slice %27 {offsets = [0, 0, 8], sizes = [2, 8, 8], strides = [1, 1, 1]} : vector<2x8x32xf32> to vector<2x8x8xf32>
    %34 = vector.extract_strided_slice %27 {offsets = [0, 0, 16], sizes = [2, 8, 8], strides = [1, 1, 1]} : vector<2x8x32xf32> to vector<2x8x8xf32>
    %35 = vector.extract_strided_slice %27 {offsets = [0, 0, 24], sizes = [2, 8, 8], strides = [1, 1, 1]} : vector<2x8x32xf32> to vector<2x8x8xf32>
    %36 = vector.shape_cast %32 : vector<2x8x8xf32> to vector<1x2x8x8xf32>
    %37 = vector.shape_cast %33 : vector<2x8x8xf32> to vector<1x2x8x8xf32>
    %38 = vector.shape_cast %34 : vector<2x8x8xf32> to vector<1x2x8x8xf32>
    %39 = vector.shape_cast %35 : vector<2x8x8xf32> to vector<1x2x8x8xf32>
    %40 = tpu.concatenate %36, %37, %38, %39 in 0 : vector<1x2x8x8xf32>, vector<1x2x8x8xf32>, vector<1x2x8x8xf32>, vector<1x2x8x8xf32> -> vector<4x2x8x8xf32>
    %41 = vector.shape_cast %40 : vector<4x2x8x8xf32> to vector<8x8x8xf32>
    %42 = vector.extract_strided_slice %29 {offsets = [0, 0, 0], sizes = [2, 8, 8], strides = [1, 1, 1]} : vector<2x8x32xf32> to vector<2x8x8xf32>
    %43 = vector.extract_strided_slice %29 {offsets = [0, 0, 8], sizes = [2, 8, 8], strides = [1, 1, 1]} : vector<2x8x32xf32> to vector<2x8x8xf32>
    %44 = vector.extract_strided_slice %29 {offsets = [0, 0, 16], sizes = [2, 8, 8], strides = [1, 1, 1]} : vector<2x8x32xf32> to vector<2x8x8xf32>
    %45 = vector.extract_strided_slice %29 {offsets = [0, 0, 24], sizes = [2, 8, 8], strides = [1, 1, 1]} : vector<2x8x32xf32> to vector<2x8x8xf32>
    %46 = vector.shape_cast %42 : vector<2x8x8xf32> to vector<1x2x8x8xf32>
    %47 = vector.shape_cast %43 : vector<2x8x8xf32> to vector<1x2x8x8xf32>
    %48 = vector.shape_cast %44 : vector<2x8x8xf32> to vector<1x2x8x8xf32>
    %49 = vector.shape_cast %45 : vector<2x8x8xf32> to vector<1x2x8x8xf32>
    %50 = tpu.concatenate %46, %47, %48, %49 in 0 : vector<1x2x8x8xf32>, vector<1x2x8x8xf32>, vector<1x2x8x8xf32>, vector<1x2x8x8xf32> -> vector<4x2x8x8xf32>
    %51 = vector.shape_cast %50 : vector<4x2x8x8xf32> to vector<8x8x8xf32>
    %52 = vector.extract_strided_slice %31 {offsets = [0, 0, 0], sizes = [2, 8, 8], strides = [1, 1, 1]} : vector<2x8x32xf32> to vector<2x8x8xf32>
    %53 = vector.extract_strided_slice %31 {offsets = [0, 0, 8], sizes = [2, 8, 8], strides = [1, 1, 1]} : vector<2x8x32xf32> to vector<2x8x8xf32>
    %54 = vector.extract_strided_slice %31 {offsets = [0, 0, 16], sizes = [2, 8, 8], strides = [1, 1, 1]} : vector<2x8x32xf32> to vector<2x8x8xf32>
    %55 = vector.extract_strided_slice %31 {offsets = [0, 0, 24], sizes = [2, 8, 8], strides = [1, 1, 1]} : vector<2x8x32xf32> to vector<2x8x8xf32>
    %56 = vector.shape_cast %52 : vector<2x8x8xf32> to vector<1x2x8x8xf32>
    %57 = vector.shape_cast %53 : vector<2x8x8xf32> to vector<1x2x8x8xf32>
    %58 = vector.shape_cast %54 : vector<2x8x8xf32> to vector<1x2x8x8xf32>
    %59 = vector.shape_cast %55 : vector<2x8x8xf32> to vector<1x2x8x8xf32>
    %60 = tpu.concatenate %56, %57, %58, %59 in 0 : vector<1x2x8x8xf32>, vector<1x2x8x8xf32>, vector<1x2x8x8xf32>, vector<1x2x8x8xf32> -> vector<4x2x8x8xf32>
    %61 = vector.shape_cast %60 : vector<4x2x8x8xf32> to vector<8x8x8xf32>
    "tpu.trace_start"() <{level = 10 : i32, message = "nqd,nkd->nqk"}> : () -> ()
    %cst_13 = arith.constant dense<0.000000e+00> : vector<8x8x8xf32>
    %62 = tpu.matmul %41, %51, %cst_13 {dimension_numbers = #tpu.dot_dimension_numbers<[2], [2], [1], [1], [0, 0, 0, 1, 1, 1], [0], [0]>} : vector<8x8x8xf32>, vector<8x8x8xf32>, vector<8x8x8xf32> -> vector<8x8x8xf32>
    "tpu.trace_stop"() : () -> ()
    %cst_14 = arith.constant dense<0xFF800000> : vector<8x8xf32>
    %63 = vector.multi_reduction <maximumf>, %62, %cst_14 [2] : vector<8x8x8xf32> to vector<8x8xf32>
    %64 = vector.shape_cast %63 : vector<8x8xf32> to vector<8x8x1xf32>
    %65 = vector.broadcast %64 : vector<8x8x1xf32> to vector<8x8x8xf32>
    %66 = arith.subf %62, %65 : vector<8x8x8xf32>
    %67 = math.exp %66 : vector<8x8x8xf32>
    %cst_15 = arith.constant dense<0.000000e+00> : vector<8x8xf32>
    %68 = vector.multi_reduction <add>, %67, %cst_15 [2] : vector<8x8x8xf32> to vector<8x8xf32>
    %69 = vector.shape_cast %68 : vector<8x8xf32> to vector<8x8x1xf32>
    %70 = tpu.reciprocal %69 {approx = true} : vector<8x8x1xf32> -> vector<8x8x1xf32>
    %71 = vector.broadcast %70 : vector<8x8x1xf32> to vector<8x8x8xf32>
    %72 = arith.mulf %67, %71 : vector<8x8x8xf32>
    "tpu.trace_start"() <{level = 10 : i32, message = "nqk,nkd->nqd"}> : () -> ()
    %cst_16 = arith.constant dense<0.000000e+00> : vector<8x8x8xf32>
    %73 = tpu.matmul %72, %61, %cst_16 {dimension_numbers = #tpu.dot_dimension_numbers<[2], [1], [1], [2], [0, 0, 0, 1, 1, 2], [0], [0]>} : vector<8x8x8xf32>, vector<8x8x8xf32>, vector<8x8x8xf32> -> vector<8x8x8xf32>
    "tpu.trace_stop"() : () -> ()
    %74 = vector.extract_strided_slice %73 {offsets = [0, 0, 0], sizes = [2, 8, 8], strides = [1, 1, 1]} : vector<8x8x8xf32> to vector<2x8x8xf32>
    %75 = vector.extract_strided_slice %73 {offsets = [2, 0, 0], sizes = [2, 8, 8], strides = [1, 1, 1]} : vector<8x8x8xf32> to vector<2x8x8xf32>
    %76 = vector.extract_strided_slice %73 {offsets = [4, 0, 0], sizes = [2, 8, 8], strides = [1, 1, 1]} : vector<8x8x8xf32> to vector<2x8x8xf32>
    %77 = vector.extract_strided_slice %73 {offsets = [6, 0, 0], sizes = [2, 8, 8], strides = [1, 1, 1]} : vector<8x8x8xf32> to vector<2x8x8xf32>
    %78 = tpu.concatenate %74, %75, %76, %77 in 2 : vector<2x8x8xf32>, vector<2x8x8xf32>, vector<2x8x8xf32>, vector<2x8x8xf32> -> vector<2x8x32xf32>
    %c0_17 = arith.constant 0 : index
    %c0_18 = arith.constant 0 : index
    %c0_19 = arith.constant 0 : index
    %79 = vector.load %arg5[%c0_17, %c0_18, %c0_19] : memref<2x8x32xf32, #tpu.memory_space<vmem>>, vector<2x8x32xf32>
    tpu.vector_store %arg5[%c0_17, %c0_18, %c0_19], %78 {strides = array<i32>} : memref<2x8x32xf32, #tpu.memory_space<vmem>>, vector<2x8x32xf32>,
    return
  }
  func.func @transform_0(%arg0: i32) -> (i32, i32, i32) {
    %c0_i32 = arith.constant 0 : i32
    %c0_i32_0 = arith.constant 0 : i32
    %c0_i32_1 = arith.constant 0 : i32
    return %arg0, %c0_i32, %c0_i32_0 : i32, i32, i32
  }
  func.func @transform_1(%arg0: i32) -> (i32, i32) {
    %c0_i32 = arith.constant 0 : i32
    %c0_i32_0 = arith.constant 0 : i32
    %c0_i32_1 = arith.constant 0 : i32
    return %c0_i32, %c0_i32_0 : i32, i32
  }
  func.func @transform_2(%arg0: i32) -> (i32, i32) {
    %c0_i32 = arith.constant 0 : i32
    %c0_i32_0 = arith.constant 0 : i32
    %c0_i32_1 = arith.constant 0 : i32
    return %c0_i32, %c0_i32_0 : i32, i32
  }
  func.func @transform_3(%arg0: i32) -> (i32, i32) {
    %c0_i32 = arith.constant 0 : i32
    %c0_i32_0 = arith.constant 0 : i32
    %c0_i32_1 = arith.constant 0 : i32
    return %c0_i32, %c0_i32_0 : i32, i32
  }
  func.func @transform_4(%arg0: i32) -> (i32, i32, i32) {
    %c0_i32 = arith.constant 0 : i32
    %c0_i32_0 = arith.constant 0 : i32
    %c0_i32_1 = arith.constant 0 : i32
    return %arg0, %c0_i32, %c0_i32_0 : i32, i32, i32
  }
}

</mosaic_0001>

<llo_original>
// kernel: tpu_custom_call.1
$region0: #{tpu_custom_call.1}
  #allocation0 [shape = 'u32[]', space=smem, size = 0x4, offset = 0x4, fixed_abs, tag = 'smem constant byte address 0x4 - core index']
  #allocation1 [shape = 'u32[144,128]{1,0:T(1,128)}', space=vmem, size = 0x12000, scoped, tag = 'internal scratch']
  %s0 = inlined_call_operand.hbm [shape: f32[2,8,32], index: 0, kind: input, shape index: {}]
  %s1 = inlined_call_operand.vmem [shape: f32[1,32], index: 1, kind: input, shape index: {}]
  %s2 = inlined_call_operand.vmem [shape: f32[1,32], index: 2, kind: input, shape index: {}]
  %s3 = inlined_call_operand.hbm [shape: f32[32,96], index: 3, kind: input, shape index: {}]
  %s4 = inlined_call_operand.hbm [shape: f32[2,8,32], index: 4, kind: output, shape index: {}]
  %s5 = sld [smem:[#allocation0]]
  $region34: #{tpu_custom_call.1} parent=0
    _
  %s7 = ssub.s32 1, %s5
  %s8 = scalar_select 0, %s7, %s5
  $region1: #{tpu_custom_call.1} parent=0
    #allocation2 [shape = 'u8[8192]{0}', space=vmem, size = 0x2000, scoped, tag = 'input window, operand 0, single buffered']
    #allocation3 [shape = 's32[1]{0}', space=sflag, size = 0x4, scoped, tag = 'scoped memory for tpu_custom_call.1']
    #allocation4 [shape = 's32[1]{0}', space=sflag, size = 0x4, scoped, tag = 'scoped memory for tpu_custom_call.1']
    #allocation5 [shape = 'u8[16384]{0}', space=vmem, size = 0x4000, scoped, tag = 'input window, operand 3, single buffered']
    #allocation6 [shape = 's32[1]{0}', space=sflag, size = 0x4, scoped, tag = 'scoped memory for tpu_custom_call.1']
    #allocation7 [shape = 'u8[8192]{0}', space=vmem, size = 0x2000, scoped, tag = 'output window, operand 0, single buffered']
    %9 = vsyncpa [#allocation3], 0
    %10 = vsyncpa [#allocation6], 0
    %11 = vsyncpa [#allocation4], 0
    // Predicated region
    $region2: #{tpu_custom_call.1} parent=1 // pred_check
      _
    $region3: #{tpu_custom_call.1} parent=1 // pred_check_branch
      %13 = sbr.rel (0) target = $region5
    $region4: #{tpu_custom_call.1} parent=1 // pred_region
      %s15 = ssub.s32 256, 256
      %16 = vsyncadd [#allocation3], %s15
      %s17 = sshll.u32 [#allocation2], 4
      %s18 = int_to_ptr.vmem [resolvable:$true] %s17
      %23 = dma.hbm_to_vmem [thread:$0]  %s0, 256, %s18, [#allocation3], 128, 128, 8
    $region5: #{tpu_custom_call.1} parent=1 // pred_fallthru
      _
    // Predicated region
    $region6: #{tpu_custom_call.1} parent=1 // pred_check
      _
    $region7: #{tpu_custom_call.1} parent=1 // pred_check_branch
      %25 = sbr.rel (0) target = $region9
    $region8: #{tpu_custom_call.1} parent=1 // pred_region
      _
    $region9: #{tpu_custom_call.1} parent=1 // pred_fallthru
      _
    // Predicated region
    $region10: #{tpu_custom_call.1} parent=1 // pred_check
      _
    $region11: #{tpu_custom_call.1} parent=1 // pred_check_branch
      %27 = sbr.rel (0) target = $region13
    $region12: #{tpu_custom_call.1} parent=1 // pred_region
      _
    $region13: #{tpu_custom_call.1} parent=1 // pred_fallthru
      _
    // Predicated region
    $region14: #{tpu_custom_call.1} parent=1 // pred_check
      _
    $region15: #{tpu_custom_call.1} parent=1 // pred_check_branch
      %29 = sbr.rel (0) target = $region17
    $region16: #{tpu_custom_call.1} parent=1 // pred_region
      %s31 = ssub.s32 512, 512
      %32 = vsyncadd [#allocation6], %s31
      %s33 = sshll.u32 [#allocation5], 4
      %s34 = int_to_ptr.vmem [resolvable:$true] %s33
      %39 = dma.hbm_to_vmem [thread:$0]  %s3, 512, %s34, [#allocation6], 128, 128, 8
    $region17: #{tpu_custom_call.1} parent=1 // pred_fallthru
      _
    // Predicated region
    $region18: #{tpu_custom_call.1} parent=1 // pred_check
      _
    $region19: #{tpu_custom_call.1} parent=1 // pred_check_branch
      %41 = sbr.rel (0) target = $region21
    $region20: #{tpu_custom_call.1} parent=1 // pred_region
      %42 = dma.done [#allocation3], 256
    $region21: #{tpu_custom_call.1} parent=1 // pred_fallthru
      _
    // Predicated region
    $region22: #{tpu_custom_call.1} parent=1 // pred_check
      _
    $region23: #{tpu_custom_call.1} parent=1 // pred_check_branch
      %44 = sbr.rel (0) target = $region25
    $region24: #{tpu_custom_call.1} parent=1 // pred_region
      %45 = dma.done [#allocation6], 512
    $region25: #{tpu_custom_call.1} parent=1 // pred_fallthru
      _
    %v46 = vld [vmem:[#allocation2] sm:$0xff]
    %v47 = vld [vmem:[#allocation2 + $0x8] sm:$0xff]
    %vm48 = vcmask 261120
    %v49 = vsel %vm48, %v46, 0.0
    %50 = vadd.xlane.f32.xlu0 %v49
    %v51 = vpop.xlane.xlu0 %50
    %v52 = vsel %vm48, %v47, 0.0
    %53 = vadd.xlane.f32.xlu0 %v52
    %v54 = vpop.xlane.xlu0 %53
    %v55 = vrcp.pop 32.0
    %v56 = vmul.f32 %v51, %v55
    %v57 = vmul.f32 %v54, %v55
    %v58 = vsub.f32 %v46, %v56
    %v59 = vsub.f32 %v47, %v57
    %v60 = vmul.f32 %v58, %v58
    %v61 = vmul.f32 %v59, %v59
    %v62 = vsel %vm48, %v60, 0.0
    %63 = vadd.xlane.f32.xlu0 %v62
    %v64 = vpop.xlane.xlu0 %63
    %v65 = vsel %vm48, %v61, 0.0
    %66 = vadd.xlane.f32.xlu0 %v65
    %v67 = vpop.xlane.xlu0 %66
    %v68 = vmul.f32 %v64, %v55
    %v69 = vmul.f32 %v67, %v55
    %v70 = vadd.f32 %v68, 1e-05
    %v71 = vadd.f32 %v69, 1e-05
    %v72 = vrsqrt.pop %v70
    %v73 = vrsqrt.pop %v71
    %v74 = vmul.f32 %v58, %v72
    %v75 = vmul.f32 %v59, %v73
    %v76 = vld [vmem:[%s1] sm:$0x1]
    %v78 = vlaneseq
    %v79 = vshrl.u32 %v78, 7
    %v80 = vsub.s32 0, %v79
    %v81 = vrot.slane %v76, %v80
    %v83 = vmul.f32 %v74, %v81
    %v84 = vmul.f32 %v75, %v81
    %v85 = vld [vmem:[%s2] sm:$0x1]
    %v87 = vlaneseq
    %v88 = vshrl.u32 %v87, 7
    %v89 = vsub.s32 0, %v88
    %v90 = vrot.slane %v85, %v89
    %v92 = vadd.f32 %v83, %v90
    %v93 = vadd.f32 %v84, %v90
    %v94 = vld [vmem:[#allocation5] sm:$0xff]
    %v95 = vld [vmem:[#allocation5 + $0x8] sm:$0xff]
    %v96 = vld [vmem:[#allocation5 + $0x10] sm:$0xff]
    %v97 = vld [vmem:[#allocation5 + $0x18] sm:$0xff]
    %v99 = vsel %vm48, %v92, 0
    %v102 = vsel %vm48, %v93, 0
    %104 = vmatprep.subr.mxu0 0.0
    %105 = vmatpush1.msra.mxu0 %v94
    %106 = vmatprep.subr.mxu0 0.0
    %107 = vmatpush1.msra.mxu0 %v95
    %108 = vmatprep.subr.mxu0 0.0
    %109 = vmatpush1.msra.mxu0 %v96
    %110 = vmatprep.subr.mxu0 0.0
    %111 = vmatpush1.msra.mxu0 %v97
    %112 = vmatprep.subr.mxu0 0.0
    %113 = vmatpush1.msra.mxu0 0.0
    %114 = vmatprep.subr.mxu0 0.0
    %115 = vmatpush1.msra.mxu0 0.0
    %116 = vmatprep.subr.mxu0 0.0
    %117 = vmatpush1.msra.mxu0 0.0
    %118 = vmatprep.subr.mxu0 0.0
    %119 = vmatpush1.msra.mxu0 0.0
    %120 = vmatprep.subr.mxu0 0.0
    %121 = vmatpush1.msra.mxu0 0.0
    %122 = vmatprep.subr.mxu0 0.0
    %123 = vmatpush1.msra.mxu0 0.0
    %124 = vmatprep.subr.mxu0 0.0
    %125 = vmatpush1.msra.mxu0 0.0
    %126 = vmatprep.subr.mxu0 0.0
    %127 = vmatpush1.msra.mxu0 0.0
    %128 = vmatprep.subr.mxu0 0.0
    %129 = vmatpush1.msra.mxu0 0.0
    %130 = vmatprep.subr.mxu0 0.0
    %131 = vmatpush1.msra.mxu0 0.0
    %132 = vmatprep.subr.mxu0 0.0
    %133 = vmatpush1.msra.mxu0 0.0
    %134 = vmatprep.subr.mxu0 0.0
    %135 = vmatpush1.msra.mxu0 0.0
    %136 = vmatprep.subr.mxu0 0.0
    %137 = vmatpush1.msra.mxu0 0.0
    %138 = vmatprep.subr.mxu0 0.0
    %139 = vmatpush1.msra.mxu0 0.0
    %140 = vmatprep.subr.mxu0 0.0
    %141 = vmatpush1.msra.mxu0 0.0
    %142 = vmatprep.subr.mxu0 0.0
    %143 = vmatpush1.msra.mxu0 0.0
    %144 = vmatprep.subr.mxu0 0.0
    %145 = vmatpush1.msra.mxu0 0.0
    %146 = vmatprep.subr.mxu0 0.0
    %147 = vmatpush1.msra.mxu0 0.0
    %148 = vmatprep.subr.mxu0 0.0
    %149 = vmatpush1.msra.mxu0 0.0
    %150 = vmatprep.subr.mxu0 0.0
    %151 = vmatpush1.msra.mxu0 0.0
    %152 = vmatprep.subr.mxu0 0.0
    %153 = vmatpush1.msra.mxu0 0.0
    %154 = vmatprep.subr.mxu0 0.0
    %155 = vmatpush1.msra.mxu0 0.0
    %156 = vmatprep.subr.mxu0 0.0
    %157 = vmatpush1.msra.mxu0 0.0
    %158 = vmatprep.subr.mxu0 0.0
    %159 = vmatpush1.msra.mxu0 0.0
    %160 = vmatprep.subr.mxu0 0.0
    %161 = vmatpush1.msra.mxu0 0.0
    %162 = vmatprep.subr.mxu0 0.0
    %163 = vmatpush1.msra.mxu0 0.0
    %164 = vmatprep.subr.mxu0 0.0
    %165 = vmatpush1.msra.mxu0 0.0
    %166 = vmatprep.subr.mxu0 0.0
    %167 = vmatpush1.msra.mxu0 0.0
    %168 = vmatprep.mubr.f32.mxu0 0.0
    %169 = vmatmul.mubr.f32.gmra.mrb[0].mxu0 %v99
    %v170 = vpop.f32.mrb[0].mxu0
    %v171 = vadd.f32 0.0, %v170
    %v172 = vpop.f32.mrb[0].mxu0
    %173 = vmatprep.mubr.f32.mxu0 0.0
    %174 = vmatmul.mubr.f32.gmra.mrb[0].mxu0 %v102
    %v175 = vpop.f32.mrb[0].mxu0
    %v176 = vadd.f32 0.0, %v175
    %v177 = vpop.f32.mrb[0].mxu0
    %178 = vdwg.mxu0
    %181 = vrot.lane.b32.xlu0 %v171, 120
    %v182 = vpop.permute.xlu0 %181
    %183 = vrot.lane.b32.xlu0 %v176, 120
    %v184 = vpop.permute.xlu0 %183
    %185 = vrot.lane.b32.xlu0 %v171, 112
    %v186 = vpop.permute.xlu0 %185
    %187 = vrot.lane.b32.xlu0 %v176, 112
    %v188 = vpop.permute.xlu0 %187
    %189 = vrot.lane.b32.xlu0 %v171, 104
    %v190 = vpop.permute.xlu0 %189
    %191 = vrot.lane.b32.xlu0 %v176, 104
    %v192 = vpop.permute.xlu0 %191
    %193 = vrot.lane.b32.xlu0 %v171, 96
    %v194 = vpop.permute.xlu0 %193
    %vm195 = vcmask 64512
    %v196 = vsel %vm195, %v171, 0
    %v198 = vsel %vm195, %v194, 0
    %200 = vmatprep.subr.mxu0 0.0
    %201 = vmatpush1.xpose.msra.mxu0 %v198
    %202 = vmatprep.subr.mxu0 0.0
    %203 = vmatpush1.xpose.msra.mxu0 0.0
    %204 = vmatprep.subr.mxu0 0.0
    %205 = vmatpush1.xpose.msra.mxu0 0.0
    %206 = vmatprep.subr.mxu0 0.0
    %207 = vmatpush1.xpose.msra.mxu0 0.0
    %208 = vmatprep.subr.mxu0 0.0
    %209 = vmatpush1.xpose.msra.mxu0 0.0
    %210 = vmatprep.subr.mxu0 0.0
    %211 = vmatpush1.xpose.msra.mxu0 0.0
    %212 = vmatprep.subr.mxu0 0.0
    %213 = vmatpush1.xpose.msra.mxu0 0.0
    %214 = vmatprep.subr.mxu0 0.0
    %215 = vmatpush1.xpose.msra.mxu0 0.0
    %216 = vmatprep.subr.mxu0 0.0
    %217 = vmatpush1.xpose.msra.mxu0 0.0
    %218 = vmatprep.subr.mxu0 0.0
    %219 = vmatpush1.xpose.msra.mxu0 0.0
    %220 = vmatprep.subr.mxu0 0.0
    %221 = vmatpush1.xpose.msra.mxu0 0.0
    %222 = vmatprep.subr.mxu0 0.0
    %223 = vmatpush1.xpose.msra.mxu0 0.0
    %224 = vmatprep.subr.mxu0 0.0
    %225 = vmatpush1.xpose.msra.mxu0 0.0
    %226 = vmatprep.subr.mxu0 0.0
    %227 = vmatpush1.xpose.msra.mxu0 0.0
    %228 = vmatprep.subr.mxu0 0.0
    %229 = vmatpush1.xpose.msra.mxu0 0.0
    %230 = vmatprep.subr.mxu0 0.0
    %231 = vmatpush1.xpose.msra.mxu0 0.0
    %232 = vmatprep.subr.mxu0 0.0
    %233 = vmatpush1.xpose.msra.mxu0 0.0
    %234 = vmatprep.subr.mxu0 0.0
    %235 = vmatpush1.xpose.msra.mxu0 0.0
    %236 = vmatprep.subr.mxu0 0.0
    %237 = vmatpush1.xpose.msra.mxu0 0.0
    %238 = vmatprep.subr.mxu0 0.0
    %239 = vmatpush1.xpose.msra.mxu0 0.0
    %240 = vmatprep.subr.mxu0 0.0
    %241 = vmatpush1.xpose.msra.mxu0 0.0
    %242 = vmatprep.subr.mxu0 0.0
    %243 = vmatpush1.xpose.msra.mxu0 0.0
    %244 = vmatprep.subr.mxu0 0.0
    %245 = vmatpush1.xpose.msra.mxu0 0.0
    %246 = vmatprep.subr.mxu0 0.0
    %247 = vmatpush1.xpose.msra.mxu0 0.0
    %248 = vmatprep.subr.mxu0 0.0
    %249 = vmatpush1.xpose.msra.mxu0 0.0
    %250 = vmatprep.subr.mxu0 0.0
    %251 = vmatpush1.xpose.msra.mxu0 0.0
    %252 = vmatprep.subr.mxu0 0.0
    %253 = vmatpush1.xpose.msra.mxu0 0.0
    %254 = vmatprep.subr.mxu0 0.0
    %255 = vmatpush1.xpose.msra.mxu0 0.0
    %256 = vmatprep.subr.mxu0 0.0
    %257 = vmatpush1.xpose.msra.mxu0 0.0
    %258 = vmatprep.subr.mxu0 0.0
    %259 = vmatpush1.xpose.msra.mxu0 0.0
    %260 = vmatprep.subr.mxu0 0.0
    %261 = vmatpush1.xpose.msra.mxu0 0.0
    %262 = vmatprep.subr.mxu0 0.0
    %263 = vmatpush1.xpose.msra.mxu0 0.0
    %264 = vmatprep.mubr.f32.mxu0 0.0
    %265 = vmatmul.mubr.f32.gmra.mrb[0].mxu0 %v196
    %v266 = vpop.f32.mrb[0].mxu0
    %v267 = vadd.f32 0.0, %v266
    %v268 = vpop.f32.mrb[0].mxu0
    %269 = vdwg.mxu0
    %270 = vrot.lane.b32.xlu0 %v176, 96
    %v271 = vpop.permute.xlu0 %270
    %v272 = vsel %vm195, %v176, 0
    %v274 = vsel %vm195, %v271, 0
    %276 = vmatprep.subr.mxu0 0.0
    %277 = vmatpush1.xpose.msra.mxu0 %v274
    %278 = vmatprep.subr.mxu0 0.0
    %279 = vmatpush1.xpose.msra.mxu0 0.0
    %280 = vmatprep.subr.mxu0 0.0
    %281 = vmatpush1.xpose.msra.mxu0 0.0
    %282 = vmatprep.subr.mxu0 0.0
    %283 = vmatpush1.xpose.msra.mxu0 0.0
    %284 = vmatprep.subr.mxu0 0.0
    %285 = vmatpush1.xpose.msra.mxu0 0.0
    %286 = vmatprep.subr.mxu0 0.0
    %287 = vmatpush1.xpose.msra.mxu0 0.0
    %288 = vmatprep.subr.mxu0 0.0
    %289 = vmatpush1.xpose.msra.mxu0 0.0
    %290 = vmatprep.subr.mxu0 0.0
    %291 = vmatpush1.xpose.msra.mxu0 0.0
    %292 = vmatprep.subr.mxu0 0.0
    %293 = vmatpush1.xpose.msra.mxu0 0.0
    %294 = vmatprep.subr.mxu0 0.0
    %295 = vmatpush1.xpose.msra.mxu0 0.0
    %296 = vmatprep.subr.mxu0 0.0
    %297 = vmatpush1.xpose.msra.mxu0 0.0
    %298 = vmatprep.subr.mxu0 0.0
    %299 = vmatpush1.xpose.msra.mxu0 0.0
    %300 = vmatprep.subr.mxu0 0.0
    %301 = vmatpush1.xpose.msra.mxu0 0.0
    %302 = vmatprep.subr.mxu0 0.0
    %303 = vmatpush1.xpose.msra.mxu0 0.0
    %304 = vmatprep.subr.mxu0 0.0
    %305 = vmatpush1.xpose.msra.mxu0 0.0
    %306 = vmatprep.subr.mxu0 0.0
    %307 = vmatpush1.xpose.msra.mxu0 0.0
    %308 = vmatprep.subr.mxu0 0.0
    %309 = vmatpush1.xpose.msra.mxu0 0.0
    %310 = vmatprep.subr.mxu0 0.0
    %311 = vmatpush1.xpose.msra.mxu0 0.0
    %312 = vmatprep.subr.mxu0 0.0
    %313 = vmatpush1.xpose.msra.mxu0 0.0
    %314 = vmatprep.subr.mxu0 0.0
    %315 = vmatpush1.xpose.msra.mxu0 0.0
    %316 = vmatprep.subr.mxu0 0.0
    %317 = vmatpush1.xpose.msra.mxu0 0.0
    %318 = vmatprep.subr.mxu0 0.0
    %319 = vmatpush1.xpose.msra.mxu0 0.0
    %320 = vmatprep.subr.mxu0 0.0
    %321 = vmatpush1.xpose.msra.mxu0 0.0
    %322 = vmatprep.subr.mxu0 0.0
    %323 = vmatpush1.xpose.msra.mxu0 0.0
    %324 = vmatprep.subr.mxu0 0.0
    %325 = vmatpush1.xpose.msra.mxu0 0.0
    %326 = vmatprep.subr.mxu0 0.0
    %327 = vmatpush1.xpose.msra.mxu0 0.0
    %328 = vmatprep.subr.mxu0 0.0
    %329 = vmatpush1.xpose.msra.mxu0 0.0
    %330 = vmatprep.subr.mxu0 0.0
    %331 = vmatpush1.xpose.msra.mxu0 0.0
    %332 = vmatprep.subr.mxu0 0.0
    %333 = vmatpush1.xpose.msra.mxu0 0.0
    %334 = vmatprep.subr.mxu0 0.0
    %335 = vmatpush1.xpose.msra.mxu0 0.0
    %336 = vmatprep.subr.mxu0 0.0
    %337 = vmatpush1.xpose.msra.mxu0 0.0
    %338 = vmatprep.subr.mxu0 0.0
    %339 = vmatpush1.xpose.msra.mxu0 0.0
    %340 = vmatprep.mubr.f32.mxu0 0.0
    %341 = vmatmul.mubr.f32.gmra.mrb[0].mxu0 %v272
    %v342 = vpop.f32.mrb[0].mxu0
    %v343 = vadd.f32 0.0, %v342
    %v344 = vpop.f32.mrb[0].mxu0
    %345 = vdwg.mxu0
    %346 = vrot.lane.b32.xlu0 %v182, 96
    %v347 = vpop.permute.xlu0 %346
    %v348 = vsel %vm195, %v182, 0
    %v350 = vsel %vm195, %v347, 0
    %352 = vmatprep.subr.mxu0 0.0
    %353 = vmatpush1.xpose.msra.mxu0 %v350
    %354 = vmatprep.subr.mxu0 0.0
    %355 = vmatpush1.xpose.msra.mxu0 0.0
    %356 = vmatprep.subr.mxu0 0.0
    %357 = vmatpush1.xpose.msra.mxu0 0.0
    %358 = vmatprep.subr.mxu0 0.0
    %359 = vmatpush1.xpose.msra.mxu0 0.0
    %360 = vmatprep.subr.mxu0 0.0
    %361 = vmatpush1.xpose.msra.mxu0 0.0
    %362 = vmatprep.subr.mxu0 0.0
    %363 = vmatpush1.xpose.msra.mxu0 0.0
    %364 = vmatprep.subr.mxu0 0.0
    %365 = vmatpush1.xpose.msra.mxu0 0.0
    %366 = vmatprep.subr.mxu0 0.0
    %367 = vmatpush1.xpose.msra.mxu0 0.0
    %368 = vmatprep.subr.mxu0 0.0
    %369 = vmatpush1.xpose.msra.mxu0 0.0
    %370 = vmatprep.subr.mxu0 0.0
    %371 = vmatpush1.xpose.msra.mxu0 0.0
    %372 = vmatprep.subr.mxu0 0.0
    %373 = vmatpush1.xpose.msra.mxu0 0.0
    %374 = vmatprep.subr.mxu0 0.0
    %375 = vmatpush1.xpose.msra.mxu0 0.0
    %376 = vmatprep.subr.mxu0 0.0
    %377 = vmatpush1.xpose.msra.mxu0 0.0
    %378 = vmatprep.subr.mxu0 0.0
    %379 = vmatpush1.xpose.msra.mxu0 0.0
    %380 = vmatprep.subr.mxu0 0.0
    %381 = vmatpush1.xpose.msra.mxu0 0.0
    %382 = vmatprep.subr.mxu0 0.0
    %383 = vmatpush1.xpose.msra.mxu0 0.0
    %384 = vmatprep.subr.mxu0 0.0
    %385 = vmatpush1.xpose.msra.mxu0 0.0
    %386 = vmatprep.subr.mxu0 0.0
    %387 = vmatpush1.xpose.msra.mxu0 0.0
    %388 = vmatprep.subr.mxu0 0.0
    %389 = vmatpush1.xpose.msra.mxu0 0.0
    %390 = vmatprep.subr.mxu0 0.0
    %391 = vmatpush1.xpose.msra.mxu0 0.0
    %392 = vmatprep.subr.mxu0 0.0
    %393 = vmatpush1.xpose.msra.mxu0 0.0
    %394 = vmatprep.subr.mxu0 0.0
    %395 = vmatpush1.xpose.msra.mxu0 0.0
    %396 = vmatprep.subr.mxu0 0.0
    %397 = vmatpush1.xpose.msra.mxu0 0.0
    %398 = vmatprep.subr.mxu0 0.0
    %399 = vmatpush1.xpose.msra.mxu0 0.0
    %400 = vmatprep.subr.mxu0 0.0
    %401 = vmatpush1.xpose.msra.mxu0 0.0
    %402 = vmatprep.subr.mxu0 0.0
    %403 = vmatpush1.xpose.msra.mxu0 0.0
    %404 = vmatprep.subr.mxu0 0.0
    %405 = vmatpush1.xpose.msra.mxu0 0.0
    %406 = vmatprep.subr.mxu0 0.0
    %407 = vmatpush1.xpose.msra.mxu0 0.0
    %408 = vmatprep.subr.mxu0 0.0
    %409 = vmatpush1.xpose.msra.mxu0 0.0
    %410 = vmatprep.subr.mxu0 0.0
    %411 = vmatpush1.xpose.msra.mxu0 0.0
    %412 = vmatprep.subr.mxu0 0.0
    %413 = vmatpush1.xpose.msra.mxu0 0.0
    %414 = vmatprep.subr.mxu0 0.0
    %415 = vmatpush1.xpose.msra.mxu0 0.0
    %416 = vmatprep.mubr.f32.mxu0 0.0
    %417 = vmatmul.mubr.f32.gmra.mrb[0].mxu0 %v348
    %v418 = vpop.f32.mrb[0].mxu0
    %v419 = vadd.f32 0.0, %v418
    %v420 = vpop.f32.mrb[0].mxu0
    %421 = vdwg.mxu0
    %422 = vrot.lane.b32.xlu0 %v184, 96
    %v423 = vpop.permute.xlu0 %422
    %v424 = vsel %vm195, %v184, 0
    %v426 = vsel %vm195, %v423, 0
    %428 = vmatprep.subr.mxu0 0.0
    %429 = vmatpush1.xpose.msra.mxu0 %v426
    %430 = vmatprep.subr.mxu0 0.0
    %431 = vmatpush1.xpose.msra.mxu0 0.0
    %432 = vmatprep.subr.mxu0 0.0
    %433 = vmatpush1.xpose.msra.mxu0 0.0
    %434 = vmatprep.subr.mxu0 0.0
    %435 = vmatpush1.xpose.msra.mxu0 0.0
    %436 = vmatprep.subr.mxu0 0.0
    %437 = vmatpush1.xpose.msra.mxu0 0.0
    %438 = vmatprep.subr.mxu0 0.0
    %439 = vmatpush1.xpose.msra.mxu0 0.0
    %440 = vmatprep.subr.mxu0 0.0
    %441 = vmatpush1.xpose.msra.mxu0 0.0
    %442 = vmatprep.subr.mxu0 0.0
    %443 = vmatpush1.xpose.msra.mxu0 0.0
    %444 = vmatprep.subr.mxu0 0.0
    %445 = vmatpush1.xpose.msra.mxu0 0.0
    %446 = vmatprep.subr.mxu0 0.0
    %447 = vmatpush1.xpose.msra.mxu0 0.0
    %448 = vmatprep.subr.mxu0 0.0
    %449 = vmatpush1.xpose.msra.mxu0 0.0
    %450 = vmatprep.subr.mxu0 0.0
    %451 = vmatpush1.xpose.msra.mxu0 0.0
    %452 = vmatprep.subr.mxu0 0.0
    %453 = vmatpush1.xpose.msra.mxu0 0.0
    %454 = vmatprep.subr.mxu0 0.0
    %455 = vmatpush1.xpose.msra.mxu0 0.0
    %456 = vmatprep.subr.mxu0 0.0
    %457 = vmatpush1.xpose.msra.mxu0 0.0
    %458 = vmatprep.subr.mxu0 0.0
    %459 = vmatpush1.xpose.msra.mxu0 0.0
    %460 = vmatprep.subr.mxu0 0.0
    %461 = vmatpush1.xpose.msra.mxu0 0.0
    %462 = vmatprep.subr.mxu0 0.0
    %463 = vmatpush1.xpose.msra.mxu0 0.0
    %464 = vmatprep.subr.mxu0 0.0
    %465 = vmatpush1.xpose.msra.mxu0 0.0
    %466 = vmatprep.subr.mxu0 0.0
    %467 = vmatpush1.xpose.msra.mxu0 0.0
    %468 = vmatprep.subr.mxu0 0.0
    %469 = vmatpush1.xpose.msra.mxu0 0.0
    %470 = vmatprep.subr.mxu0 0.0
    %471 = vmatpush1.xpose.msra.mxu0 0.0
    %472 = vmatprep.subr.mxu0 0.0
    %473 = vmatpush1.xpose.msra.mxu0 0.0
    %474 = vmatprep.subr.mxu0 0.0
    %475 = vmatpush1.xpose.msra.mxu0 0.0
    %476 = vmatprep.subr.mxu0 0.0
    %477 = vmatpush1.xpose.msra.mxu0 0.0
    %478 = vmatprep.subr.mxu0 0.0
    %479 = vmatpush1.xpose.msra.mxu0 0.0
    %480 = vmatprep.subr.mxu0 0.0
    %481 = vmatpush1.xpose.msra.mxu0 0.0
    %482 = vmatprep.subr.mxu0 0.0
    %483 = vmatpush1.xpose.msra.mxu0 0.0
    %484 = vmatprep.subr.mxu0 0.0
    %485 = vmatpush1.xpose.msra.mxu0 0.0
    %486 = vmatprep.subr.mxu0 0.0
    %487 = vmatpush1.xpose.msra.mxu0 0.0
    %488 = vmatprep.subr.mxu0 0.0
    %489 = vmatpush1.xpose.msra.mxu0 0.0
    %490 = vmatprep.subr.mxu0 0.0
    %491 = vmatpush1.xpose.msra.mxu0 0.0
    %492 = vmatprep.mubr.f32.mxu0 0.0
    %493 = vmatmul.mubr.f32.gmra.mrb[0].mxu0 %v424
    %v494 = vpop.f32.mrb[0].mxu0
    %v495 = vadd.f32 0.0, %v494
    %v496 = vpop.f32.mrb[0].mxu0
    %497 = vdwg.mxu0
    %498 = vrot.lane.b32.xlu0 %v186, 96
    %v499 = vpop.permute.xlu0 %498
    %v500 = vsel %vm195, %v186, 0
    %v502 = vsel %vm195, %v499, 0
    %504 = vmatprep.subr.mxu0 0.0
    %505 = vmatpush1.xpose.msra.mxu0 %v502
    %506 = vmatprep.subr.mxu0 0.0
    %507 = vmatpush1.xpose.msra.mxu0 0.0
    %508 = vmatprep.subr.mxu0 0.0
    %509 = vmatpush1.xpose.msra.mxu0 0.0
    %510 = vmatprep.subr.mxu0 0.0
    %511 = vmatpush1.xpose.msra.mxu0 0.0
    %512 = vmatprep.subr.mxu0 0.0
    %513 = vmatpush1.xpose.msra.mxu0 0.0
    %514 = vmatprep.subr.mxu0 0.0
    %515 = vmatpush1.xpose.msra.mxu0 0.0
    %516 = vmatprep.subr.mxu0 0.0
    %517 = vmatpush1.xpose.msra.mxu0 0.0
    %518 = vmatprep.subr.mxu0 0.0
    %519 = vmatpush1.xpose.msra.mxu0 0.0
    %520 = vmatprep.subr.mxu0 0.0
    %521 = vmatpush1.xpose.msra.mxu0 0.0
    %522 = vmatprep.subr.mxu0 0.0
    %523 = vmatpush1.xpose.msra.mxu0 0.0
    %524 = vmatprep.subr.mxu0 0.0
    %525 = vmatpush1.xpose.msra.mxu0 0.0
    %526 = vmatprep.subr.mxu0 0.0
    %527 = vmatpush1.xpose.msra.mxu0 0.0
    %528 = vmatprep.subr.mxu0 0.0
    %529 = vmatpush1.xpose.msra.mxu0 0.0
    %530 = vmatprep.subr.mxu0 0.0
    %531 = vmatpush1.xpose.msra.mxu0 0.0
    %532 = vmatprep.subr.mxu0 0.0
    %533 = vmatpush1.xpose.msra.mxu0 0.0
    %534 = vmatprep.subr.mxu0 0.0
    %535 = vmatpush1.xpose.msra.mxu0 0.0
    %536 = vmatprep.subr.mxu0 0.0
    %537 = vmatpush1.xpose.msra.mxu0 0.0
    %538 = vmatprep.subr.mxu0 0.0
    %539 = vmatpush1.xpose.msra.mxu0 0.0
    %540 = vmatprep.subr.mxu0 0.0
    %541 = vmatpush1.xpose.msra.mxu0 0.0
    %542 = vmatprep.subr.mxu0 0.0
    %543 = vmatpush1.xpose.msra.mxu0 0.0
    %544 = vmatprep.subr.mxu0 0.0
    %545 = vmatpush1.xpose.msra.mxu0 0.0
    %546 = vmatprep.subr.mxu0 0.0
    %547 = vmatpush1.xpose.msra.mxu0 0.0
    %548 = vmatprep.subr.mxu0 0.0
    %549 = vmatpush1.xpose.msra.mxu0 0.0
    %550 = vmatprep.subr.mxu0 0.0
    %551 = vmatpush1.xpose.msra.mxu0 0.0
    %552 = vmatprep.subr.mxu0 0.0
    %553 = vmatpush1.xpose.msra.mxu0 0.0
    %554 = vmatprep.subr.mxu0 0.0
    %555 = vmatpush1.xpose.msra.mxu0 0.0
    %556 = vmatprep.subr.mxu0 0.0
    %557 = vmatpush1.xpose.msra.mxu0 0.0
    %558 = vmatprep.subr.mxu0 0.0
    %559 = vmatpush1.xpose.msra.mxu0 0.0
    %560 = vmatprep.subr.mxu0 0.0
    %561 = vmatpush1.xpose.msra.mxu0 0.0
    %562 = vmatprep.subr.mxu0 0.0
    %563 = vmatpush1.xpose.msra.mxu0 0.0
    %564 = vmatprep.subr.mxu0 0.0
    %565 = vmatpush1.xpose.msra.mxu0 0.0
    %566 = vmatprep.subr.mxu0 0.0
    %567 = vmatpush1.xpose.msra.mxu0 0.0
    %568 = vmatprep.mubr.f32.mxu0 0.0
    %569 = vmatmul.mubr.f32.gmra.mrb[0].mxu0 %v500
    %v570 = vpop.f32.mrb[0].mxu0
    %v571 = vadd.f32 0.0, %v570
    %v572 = vpop.f32.mrb[0].mxu0
    %573 = vdwg.mxu0
    %574 = vrot.lane.b32.xlu0 %v188, 96
    %v575 = vpop.permute.xlu0 %574
    %v576 = vsel %vm195, %v188, 0
    %v578 = vsel %vm195, %v575, 0
    %580 = vmatprep.subr.mxu0 0.0
    %581 = vmatpush1.xpose.msra.mxu0 %v578
    %582 = vmatprep.subr.mxu0 0.0
    %583 = vmatpush1.xpose.msra.mxu0 0.0
    %584 = vmatprep.subr.mxu0 0.0
    %585 = vmatpush1.xpose.msra.mxu0 0.0
    %586 = vmatprep.subr.mxu0 0.0
    %587 = vmatpush1.xpose.msra.mxu0 0.0
    %588 = vmatprep.subr.mxu0 0.0
    %589 = vmatpush1.xpose.msra.mxu0 0.0
    %590 = vmatprep.subr.mxu0 0.0
    %591 = vmatpush1.xpose.msra.mxu0 0.0
    %592 = vmatprep.subr.mxu0 0.0
    %593 = vmatpush1.xpose.msra.mxu0 0.0
    %594 = vmatprep.subr.mxu0 0.0
    %595 = vmatpush1.xpose.msra.mxu0 0.0
    %596 = vmatprep.subr.mxu0 0.0
    %597 = vmatpush1.xpose.msra.mxu0 0.0
    %598 = vmatprep.subr.mxu0 0.0
    %599 = vmatpush1.xpose.msra.mxu0 0.0
    %600 = vmatprep.subr.mxu0 0.0
    %601 = vmatpush1.xpose.msra.mxu0 0.0
    %602 = vmatprep.subr.mxu0 0.0
    %603 = vmatpush1.xpose.msra.mxu0 0.0
    %604 = vmatprep.subr.mxu0 0.0
    %605 = vmatpush1.xpose.msra.mxu0 0.0
    %606 = vmatprep.subr.mxu0 0.0
    %607 = vmatpush1.xpose.msra.mxu0 0.0
    %608 = vmatprep.subr.mxu0 0.0
    %609 = vmatpush1.xpose.msra.mxu0 0.0
    %610 = vmatprep.subr.mxu0 0.0
    %611 = vmatpush1.xpose.msra.mxu0 0.0
    %612 = vmatprep.subr.mxu0 0.0
    %613 = vmatpush1.xpose.msra.mxu0 0.0
    %614 = vmatprep.subr.mxu0 0.0
    %615 = vmatpush1.xpose.msra.mxu0 0.0
    %616 = vmatprep.subr.mxu0 0.0
    %617 = vmatpush1.xpose.msra.mxu0 0.0
    %618 = vmatprep.subr.mxu0 0.0
    %619 = vmatpush1.xpose.msra.mxu0 0.0
    %620 = vmatprep.subr.mxu0 0.0
    %621 = vmatpush1.xpose.msra.mxu0 0.0
    %622 = vmatprep.subr.mxu0 0.0
    %623 = vmatpush1.xpose.msra.mxu0 0.0
    %624 = vmatprep.subr.mxu0 0.0
    %625 = vmatpush1.xpose.msra.mxu0 0.0
    %626 = vmatprep.subr.mxu0 0.0
    %627 = vmatpush1.xpose.msra.mxu0 0.0
    %628 = vmatprep.subr.mxu0 0.0
    %629 = vmatpush1.xpose.msra.mxu0 0.0
    %630 = vmatprep.subr.mxu0 0.0
    %631 = vmatpush1.xpose.msra.mxu0 0.0
    %632 = vmatprep.subr.mxu0 0.0
    %633 = vmatpush1.xpose.msra.mxu0 0.0
    %634 = vmatprep.subr.mxu0 0.0
    %635 = vmatpush1.xpose.msra.mxu0 0.0
    %636 = vmatprep.subr.mxu0 0.0
    %637 = vmatpush1.xpose.msra.mxu0 0.0
    %638 = vmatprep.subr.mxu0 0.0
    %639 = vmatpush1.xpose.msra.mxu0 0.0
    %640 = vmatprep.subr.mxu0 0.0
    %641 = vmatpush1.xpose.msra.mxu0 0.0
    %642 = vmatprep.subr.mxu0 0.0
    %643 = vmatpush1.xpose.msra.mxu0 0.0
    %644 = vmatprep.mubr.f32.mxu0 0.0
    %645 = vmatmul.mubr.f32.gmra.mrb[0].mxu0 %v576
    %v646 = vpop.f32.mrb[0].mxu0
    %v647 = vadd.f32 0.0, %v646
    %v648 = vpop.f32.mrb[0].mxu0
    %649 = vdwg.mxu0
    %650 = vrot.lane.b32.xlu0 %v190, 96
    %v651 = vpop.permute.xlu0 %650
    %v652 = vsel %vm195, %v190, 0
    %v654 = vsel %vm195, %v651, 0
    %656 = vmatprep.subr.mxu0 0.0
    %657 = vmatpush1.xpose.msra.mxu0 %v654
    %658 = vmatprep.subr.mxu0 0.0
    %659 = vmatpush1.xpose.msra.mxu0 0.0
    %660 = vmatprep.subr.mxu0 0.0
    %661 = vmatpush1.xpose.msra.mxu0 0.0
    %662 = vmatprep.subr.mxu0 0.0
    %663 = vmatpush1.xpose.msra.mxu0 0.0
    %664 = vmatprep.subr.mxu0 0.0
    %665 = vmatpush1.xpose.msra.mxu0 0.0
    %666 = vmatprep.subr.mxu0 0.0
    %667 = vmatpush1.xpose.msra.mxu0 0.0
    %668 = vmatprep.subr.mxu0 0.0
    %669 = vmatpush1.xpose.msra.mxu0 0.0
    %670 = vmatprep.subr.mxu0 0.0
    %671 = vmatpush1.xpose.msra.mxu0 0.0
    %672 = vmatprep.subr.mxu0 0.0
    %673 = vmatpush1.xpose.msra.mxu0 0.0
    %674 = vmatprep.subr.mxu0 0.0
    %675 = vmatpush1.xpose.msra.mxu0 0.0
    %676 = vmatprep.subr.mxu0 0.0
    %677 = vmatpush1.xpose.msra.mxu0 0.0
    %678 = vmatprep.subr.mxu0 0.0
    %679 = vmatpush1.xpose.msra.mxu0 0.0
    %680 = vmatprep.subr.mxu0 0.0
    %681 = vmatpush1.xpose.msra.mxu0 0.0
    %682 = vmatprep.subr.mxu0 0.0
    %683 = vmatpush1.xpose.msra.mxu0 0.0
    %684 = vmatprep.subr.mxu0 0.0
    %685 = vmatpush1.xpose.msra.mxu0 0.0
    %686 = vmatprep.subr.mxu0 0.0
    %687 = vmatpush1.xpose.msra.mxu0 0.0
    %688 = vmatprep.subr.mxu0 0.0
    %689 = vmatpush1.xpose.msra.mxu0 0.0
    %690 = vmatprep.subr.mxu0 0.0
    %691 = vmatpush1.xpose.msra.mxu0 0.0
    %692 = vmatprep.subr.mxu0 0.0
    %693 = vmatpush1.xpose.msra.mxu0 0.0
    %694 = vmatprep.subr.mxu0 0.0
    %695 = vmatpush1.xpose.msra.mxu0 0.0
    %696 = vmatprep.subr.mxu0 0.0
    %697 = vmatpush1.xpose.msra.mxu0 0.0
    %698 = vmatprep.subr.mxu0 0.0
    %699 = vmatpush1.xpose.msra.mxu0 0.0
    %700 = vmatprep.subr.mxu0 0.0
    %701 = vmatpush1.xpose.msra.mxu0 0.0
    %702 = vmatprep.subr.mxu0 0.0
    %703 = vmatpush1.xpose.msra.mxu0 0.0
    %704 = vmatprep.subr.mxu0 0.0
    %705 = vmatpush1.xpose.msra.mxu0 0.0
    %706 = vmatprep.subr.mxu0 0.0
    %707 = vmatpush1.xpose.msra.mxu0 0.0
    %708 = vmatprep.subr.mxu0 0.0
    %709 = vmatpush1.xpose.msra.mxu0 0.0
    %710 = vmatprep.subr.mxu0 0.0
    %711 = vmatpush1.xpose.msra.mxu0 0.0
    %712 = vmatprep.subr.mxu0 0.0
    %713 = vmatpush1.xpose.msra.mxu0 0.0
    %714 = vmatprep.subr.mxu0 0.0
    %715 = vmatpush1.xpose.msra.mxu0 0.0
    %716 = vmatprep.subr.mxu0 0.0
    %717 = vmatpush1.xpose.msra.mxu0 0.0
    %718 = vmatprep.subr.mxu0 0.0
    %719 = vmatpush1.xpose.msra.mxu0 0.0
    %720 = vmatprep.mubr.f32.mxu0 0.0
    %721 = vmatmul.mubr.f32.gmra.mrb[0].mxu0 %v652
    %v722 = vpop.f32.mrb[0].mxu0
    %v723 = vadd.f32 0.0, %v722
    %v724 = vpop.f32.mrb[0].mxu0
    %725 = vdwg.mxu0
    %726 = vrot.lane.b32.xlu0 %v192, 96
    %v727 = vpop.permute.xlu0 %726
    %v728 = vsel %vm195, %v192, 0
    %v730 = vsel %vm195, %v727, 0
    %732 = vmatprep.subr.mxu0 0.0
    %733 = vmatpush1.xpose.msra.mxu0 %v730
    %734 = vmatprep.subr.mxu0 0.0
    %735 = vmatpush1.xpose.msra.mxu0 0.0
    %736 = vmatprep.subr.mxu0 0.0
    %737 = vmatpush1.xpose.msra.mxu0 0.0
    %738 = vmatprep.subr.mxu0 0.0
    %739 = vmatpush1.xpose.msra.mxu0 0.0
    %740 = vmatprep.subr.mxu0 0.0
    %741 = vmatpush1.xpose.msra.mxu0 0.0
    %742 = vmatprep.subr.mxu0 0.0
    %743 = vmatpush1.xpose.msra.mxu0 0.0
    %744 = vmatprep.subr.mxu0 0.0
    %745 = vmatpush1.xpose.msra.mxu0 0.0
    %746 = vmatprep.subr.mxu0 0.0
    %747 = vmatpush1.xpose.msra.mxu0 0.0
    %748 = vmatprep.subr.mxu0 0.0
    %749 = vmatpush1.xpose.msra.mxu0 0.0
    %750 = vmatprep.subr.mxu0 0.0
    %751 = vmatpush1.xpose.msra.mxu0 0.0
    %752 = vmatprep.subr.mxu0 0.0
    %753 = vmatpush1.xpose.msra.mxu0 0.0
    %754 = vmatprep.subr.mxu0 0.0
    %755 = vmatpush1.xpose.msra.mxu0 0.0
    %756 = vmatprep.subr.mxu0 0.0
    %757 = vmatpush1.xpose.msra.mxu0 0.0
    %758 = vmatprep.subr.mxu0 0.0
    %759 = vmatpush1.xpose.msra.mxu0 0.0
    %760 = vmatprep.subr.mxu0 0.0
    %761 = vmatpush1.xpose.msra.mxu0 0.0
    %762 = vmatprep.subr.mxu0 0.0
    %763 = vmatpush1.xpose.msra.mxu0 0.0
    %764 = vmatprep.subr.mxu0 0.0
    %765 = vmatpush1.xpose.msra.mxu0 0.0
    %766 = vmatprep.subr.mxu0 0.0
    %767 = vmatpush1.xpose.msra.mxu0 0.0
    %768 = vmatprep.subr.mxu0 0.0
    %769 = vmatpush1.xpose.msra.mxu0 0.0
    %770 = vmatprep.subr.mxu0 0.0
    %771 = vmatpush1.xpose.msra.mxu0 0.0
    %772 = vmatprep.subr.mxu0 0.0
    %773 = vmatpush1.xpose.msra.mxu0 0.0
    %774 = vmatprep.subr.mxu0 0.0
    %775 = vmatpush1.xpose.msra.mxu0 0.0
    %776 = vmatprep.subr.mxu0 0.0
    %777 = vmatpush1.xpose.msra.mxu0 0.0
    %778 = vmatprep.subr.mxu0 0.0
    %779 = vmatpush1.xpose.msra.mxu0 0.0
    %780 = vmatprep.subr.mxu0 0.0
    %781 = vmatpush1.xpose.msra.mxu0 0.0
    %782 = vmatprep.subr.mxu0 0.0
    %783 = vmatpush1.xpose.msra.mxu0 0.0
    %784 = vmatprep.subr.mxu0 0.0
    %785 = vmatpush1.xpose.msra.mxu0 0.0
    %786 = vmatprep.subr.mxu0 0.0
    %787 = vmatpush1.xpose.msra.mxu0 0.0
    %788 = vmatprep.subr.mxu0 0.0
    %789 = vmatpush1.xpose.msra.mxu0 0.0
    %790 = vmatprep.subr.mxu0 0.0
    %791 = vmatpush1.xpose.msra.mxu0 0.0
    %792 = vmatprep.subr.mxu0 0.0
    %793 = vmatpush1.xpose.msra.mxu0 0.0
    %794 = vmatprep.subr.mxu0 0.0
    %795 = vmatpush1.xpose.msra.mxu0 0.0
    %796 = vmatprep.mubr.f32.mxu0 0.0
    %797 = vmatmul.mubr.f32.gmra.mrb[0].mxu0 %v728
    %v798 = vpop.f32.mrb[0].mxu0
    %v799 = vadd.f32 0.0, %v798
    %v800 = vpop.f32.mrb[0].mxu0
    %801 = vdwg.mxu0
    %v802 = vsel %vm195, %v267, -inf
    %803 = vmax.xlane.f32.xlu0 %v802
    %v804 = vpop.xlane.xlu0 %803
    %v805 = vsel %vm195, %v343, -inf
    %806 = vmax.xlane.f32.xlu0 %v805
    %v807 = vpop.xlane.xlu0 %806
    %v808 = vsel %vm195, %v419, -inf
    %809 = vmax.xlane.f32.xlu0 %v808
    %v810 = vpop.xlane.xlu0 %809
    %v811 = vsel %vm195, %v495, -inf
    %812 = vmax.xlane.f32.xlu0 %v811
    %v813 = vpop.xlane.xlu0 %812
    %v814 = vsel %vm195, %v571, -inf
    %815 = vmax.xlane.f32.xlu0 %v814
    %v816 = vpop.xlane.xlu0 %815
    %v817 = vsel %vm195, %v647, -inf
    %818 = vmax.xlane.f32.xlu0 %v817
    %v819 = vpop.xlane.xlu0 %818
    %v820 = vsel %vm195, %v723, -inf
    %821 = vmax.xlane.f32.xlu0 %v820
    %v822 = vpop.xlane.xlu0 %821
    %v823 = vsel %vm195, %v799, -inf
    %824 = vmax.xlane.f32.xlu0 %v823
    %v825 = vpop.xlane.xlu0 %824
    %v826 = vsub.f32 %v267, %v804
    %v827 = vsub.f32 %v343, %v807
    %v828 = vsub.f32 %v419, %v810
    %v829 = vsub.f32 %v495, %v813
    %v830 = vsub.f32 %v571, %v816
    %v831 = vsub.f32 %v647, %v819
    %v832 = vsub.f32 %v723, %v822
    %v833 = vsub.f32 %v799, %v825
    %v834 = vmul.f32 %v826, 1.442695
    %v835 = vpow.pop %v834
    %v836 = vmul.f32 %v827, 1.442695
    %v837 = vpow.pop %v836
    %v838 = vmul.f32 %v828, 1.442695
    %v839 = vpow.pop %v838
    %v840 = vmul.f32 %v829, 1.442695
    %v841 = vpow.pop %v840
    %v842 = vmul.f32 %v830, 1.442695
    %v843 = vpow.pop %v842
    %v844 = vmul.f32 %v831, 1.442695
    %v845 = vpow.pop %v844
    %v846 = vmul.f32 %v832, 1.442695
    %v847 = vpow.pop %v846
    %v848 = vmul.f32 %v833, 1.442695
    %v849 = vpow.pop %v848
    %v850 = vsel %vm195, %v835, 0.0
    %851 = vadd.xlane.f32.xlu0 %v850
    %v852 = vpop.xlane.xlu0 %851
    %v853 = vsel %vm195, %v837, 0.0
    %854 = vadd.xlane.f32.xlu0 %v853
    %v855 = vpop.xlane.xlu0 %854
    %v856 = vsel %vm195, %v839, 0.0
    %857 = vadd.xlane.f32.xlu0 %v856
    %v858 = vpop.xlane.xlu0 %857
    %v859 = vsel %vm195, %v841, 0.0
    %860 = vadd.xlane.f32.xlu0 %v859
    %v861 = vpop.xlane.xlu0 %860
    %v862 = vsel %vm195, %v843, 0.0
    %863 = vadd.xlane.f32.xlu0 %v862
    %v864 = vpop.xlane.xlu0 %863
    %v865 = vsel %vm195, %v845, 0.0
    %866 = vadd.xlane.f32.xlu0 %v865
    %v867 = vpop.xlane.xlu0 %866
    %v868 = vsel %vm195, %v847, 0.0
    %869 = vadd.xlane.f32.xlu0 %v868
    %v870 = vpop.xlane.xlu0 %869
    %v871 = vsel %vm195, %v849, 0.0
    %872 = vadd.xlane.f32.xlu0 %v871
    %v873 = vpop.xlane.xlu0 %872
    %v874 = vrcp.pop %v852
    %v875 = vrcp.pop %v855
    %v876 = vrcp.pop %v858
    %v877 = vrcp.pop %v861
    %v878 = vrcp.pop %v864
    %v879 = vrcp.pop %v867
    %v880 = vrcp.pop %v870
    %v881 = vrcp.pop %v873
    %v882 = vmul.f32 %v835, %v874
    %v883 = vmul.f32 %v837, %v875
    %v884 = vmul.f32 %v839, %v876
    %v885 = vmul.f32 %v841, %v877
    %v886 = vmul.f32 %v843, %v878
    %v887 = vmul.f32 %v845, %v879
    %v888 = vmul.f32 %v847, %v880
    %v889 = vmul.f32 %v849, %v881
    %890 = vrot.lane.b32.xlu0 %v171, 64
    %v891 = vpop.permute.xlu0 %890
    %v894 = vsel %vm195, %v882, 0
    %896 = vmatprep.subr.mxu0 0.0
    %897 = vmatpush1.msra.mxu0 %v891
    %898 = vmatprep.subr.mxu0 0.0
    %899 = vmatpush1.msra.mxu0 0.0
    %900 = vmatprep.subr.mxu0 0.0
    %901 = vmatpush1.msra.mxu0 0.0
    %902 = vmatprep.subr.mxu0 0.0
    %903 = vmatpush1.msra.mxu0 0.0
    %904 = vmatprep.subr.mxu0 0.0
    %905 = vmatpush1.msra.mxu0 0.0
    %906 = vmatprep.subr.mxu0 0.0
    %907 = vmatpush1.msra.mxu0 0.0
    %908 = vmatprep.subr.mxu0 0.0
    %909 = vmatpush1.msra.mxu0 0.0
    %910 = vmatprep.subr.mxu0 0.0
    %911 = vmatpush1.msra.mxu0 0.0
    %912 = vmatprep.subr.mxu0 0.0
    %913 = vmatpush1.msra.mxu0 0.0
    %914 = vmatprep.subr.mxu0 0.0
    %915 = vmatpush1.msra.mxu0 0.0
    %916 = vmatprep.subr.mxu0 0.0
    %917 = vmatpush1.msra.mxu0 0.0
    %918 = vmatprep.subr.mxu0 0.0
    %919 = vmatpush1.msra.mxu0 0.0
    %920 = vmatprep.subr.mxu0 0.0
    %921 = vmatpush1.msra.mxu0 0.0
    %922 = vmatprep.subr.mxu0 0.0
    %923 = vmatpush1.msra.mxu0 0.0
    %924 = vmatprep.subr.mxu0 0.0
    %925 = vmatpush1.msra.mxu0 0.0
    %926 = vmatprep.subr.mxu0 0.0
    %927 = vmatpush1.msra.mxu0 0.0
    %928 = vmatprep.subr.mxu0 0.0
    %929 = vmatpush1.msra.mxu0 0.0
    %930 = vmatprep.subr.mxu0 0.0
    %931 = vmatpush1.msra.mxu0 0.0
    %932 = vmatprep.subr.mxu0 0.0
    %933 = vmatpush1.msra.mxu0 0.0
    %934 = vmatprep.subr.mxu0 0.0
    %935 = vmatpush1.msra.mxu0 0.0
    %936 = vmatprep.subr.mxu0 0.0
    %937 = vmatpush1.msra.mxu0 0.0
    %938 = vmatprep.subr.mxu0 0.0
    %939 = vmatpush1.msra.mxu0 0.0
    %940 = vmatprep.subr.mxu0 0.0
    %941 = vmatpush1.msra.mxu0 0.0
    %942 = vmatprep.subr.mxu0 0.0
    %943 = vmatpush1.msra.mxu0 0.0
    %944 = vmatprep.subr.mxu0 0.0
    %945 = vmatpush1.msra.mxu0 0.0
    %946 = vmatprep.subr.mxu0 0.0
    %947 = vmatpush1.msra.mxu0 0.0
    %948 = vmatprep.subr.mxu0 0.0
    %949 = vmatpush1.msra.mxu0 0.0
    %950 = vmatprep.subr.mxu0 0.0
    %951 = vmatpush1.msra.mxu0 0.0
    %952 = vmatprep.subr.mxu0 0.0
    %953 = vmatpush1.msra.mxu0 0.0
    %954 = vmatprep.subr.mxu0 0.0
    %955 = vmatpush1.msra.mxu0 0.0
    %956 = vmatprep.subr.mxu0 0.0
    %957 = vmatpush1.msra.mxu0 0.0
    %958 = vmatprep.subr.mxu0 0.0
    %959 = vmatpush1.msra.mxu0 0.0
    %960 = vmatprep.mubr.f32.mxu0 0.0
    %961 = vmatmul.mubr.f32.gmra.mrb[0].mxu0 %v894
    %v962 = vpop.f32.mrb[0].mxu0
    %v963 = vadd.f32 0.0, %v962
    %v964 = vpop.f32.mrb[0].mxu0
    %965 = vdwg.mxu0
    %966 = vrot.lane.b32.xlu0 %v176, 64
    %v967 = vpop.permute.xlu0 %966
    %v970 = vsel %vm195, %v883, 0
    %972 = vmatprep.subr.mxu0 0.0
    %973 = vmatpush1.msra.mxu0 %v967
    %974 = vmatprep.subr.mxu0 0.0
    %975 = vmatpush1.msra.mxu0 0.0
    %976 = vmatprep.subr.mxu0 0.0
    %977 = vmatpush1.msra.mxu0 0.0
    %978 = vmatprep.subr.mxu0 0.0
    %979 = vmatpush1.msra.mxu0 0.0
    %980 = vmatprep.subr.mxu0 0.0
    %981 = vmatpush1.msra.mxu0 0.0
    %982 = vmatprep.subr.mxu0 0.0
    %983 = vmatpush1.msra.mxu0 0.0
    %984 = vmatprep.subr.mxu0 0.0
    %985 = vmatpush1.msra.mxu0 0.0
    %986 = vmatprep.subr.mxu0 0.0
    %987 = vmatpush1.msra.mxu0 0.0
    %988 = vmatprep.subr.mxu0 0.0
    %989 = vmatpush1.msra.mxu0 0.0
    %990 = vmatprep.subr.mxu0 0.0
    %991 = vmatpush1.msra.mxu0 0.0
    %992 = vmatprep.subr.mxu0 0.0
    %993 = vmatpush1.msra.mxu0 0.0
    %994 = vmatprep.subr.mxu0 0.0
    %995 = vmatpush1.msra.mxu0 0.0
    %996 = vmatprep.subr.mxu0 0.0
    %997 = vmatpush1.msra.mxu0 0.0
    %998 = vmatprep.subr.mxu0 0.0
    %999 = vmatpush1.msra.mxu0 0.0
    %1000 = vmatprep.subr.mxu0 0.0
    %1001 = vmatpush1.msra.mxu0 0.0
    %1002 = vmatprep.subr.mxu0 0.0
    %1003 = vmatpush1.msra.mxu0 0.0
    %1004 = vmatprep.subr.mxu0 0.0
    %1005 = vmatpush1.msra.mxu0 0.0
    %1006 = vmatprep.subr.mxu0 0.0
    %1007 = vmatpush1.msra.mxu0 0.0
    %1008 = vmatprep.subr.mxu0 0.0
    %1009 = vmatpush1.msra.mxu0 0.0
    %1010 = vmatprep.subr.mxu0 0.0
    %1011 = vmatpush1.msra.mxu0 0.0
    %1012 = vmatprep.subr.mxu0 0.0
    %1013 = vmatpush1.msra.mxu0 0.0
    %1014 = vmatprep.subr.mxu0 0.0
    %1015 = vmatpush1.msra.mxu0 0.0
    %1016 = vmatprep.subr.mxu0 0.0
    %1017 = vmatpush1.msra.mxu0 0.0
    %1018 = vmatprep.subr.mxu0 0.0
    %1019 = vmatpush1.msra.mxu0 0.0
    %1020 = vmatprep.subr.mxu0 0.0
    %1021 = vmatpush1.msra.mxu0 0.0
    %1022 = vmatprep.subr.mxu0 0.0
    %1023 = vmatpush1.msra.mxu0 0.0
    %1024 = vmatprep.subr.mxu0 0.0
    %1025 = vmatpush1.msra.mxu0 0.0
    %1026 = vmatprep.subr.mxu0 0.0
    %1027 = vmatpush1.msra.mxu0 0.0
    %1028 = vmatprep.subr.mxu0 0.0
    %1029 = vmatpush1.msra.mxu0 0.0
    %1030 = vmatprep.subr.mxu0 0.0
    %1031 = vmatpush1.msra.mxu0 0.0
    %1032 = vmatprep.subr.mxu0 0.0
    %1033 = vmatpush1.msra.mxu0 0.0
    %1034 = vmatprep.subr.mxu0 0.0
    %1035 = vmatpush1.msra.mxu0 0.0
    %1036 = vmatprep.mubr.f32.mxu0 0.0
    %1037 = vmatmul.mubr.f32.gmra.mrb[0].mxu0 %v970
    %v1038 = vpop.f32.mrb[0].mxu0
    %v1039 = vadd.f32 0.0, %v1038
    %v1040 = vpop.f32.mrb[0].mxu0
    %1041 = vdwg.mxu0
    %1042 = vrot.lane.b32.xlu0 %v182, 64
    %v1043 = vpop.permute.xlu0 %1042
    %v1046 = vsel %vm195, %v884, 0
    %1048 = vmatprep.subr.mxu0 0.0
    %1049 = vmatpush1.msra.mxu0 %v1043
    %1050 = vmatprep.subr.mxu0 0.0
    %1051 = vmatpush1.msra.mxu0 0.0
    %1052 = vmatprep.subr.mxu0 0.0
    %1053 = vmatpush1.msra.mxu0 0.0
    %1054 = vmatprep.subr.mxu0 0.0
    %1055 = vmatpush1.msra.mxu0 0.0
    %1056 = vmatprep.subr.mxu0 0.0
    %1057 = vmatpush1.msra.mxu0 0.0
    %1058 = vmatprep.subr.mxu0 0.0
    %1059 = vmatpush1.msra.mxu0 0.0
    %1060 = vmatprep.subr.mxu0 0.0
    %1061 = vmatpush1.msra.mxu0 0.0
    %1062 = vmatprep.subr.mxu0 0.0
    %1063 = vmatpush1.msra.mxu0 0.0
    %1064 = vmatprep.subr.mxu0 0.0
    %1065 = vmatpush1.msra.mxu0 0.0
    %1066 = vmatprep.subr.mxu0 0.0
    %1067 = vmatpush1.msra.mxu0 0.0
    %1068 = vmatprep.subr.mxu0 0.0
    %1069 = vmatpush1.msra.mxu0 0.0
    %1070 = vmatprep.subr.mxu0 0.0
    %1071 = vmatpush1.msra.mxu0 0.0
    %1072 = vmatprep.subr.mxu0 0.0
    %1073 = vmatpush1.msra.mxu0 0.0
    %1074 = vmatprep.subr.mxu0 0.0
    %1075 = vmatpush1.msra.mxu0 0.0
    %1076 = vmatprep.subr.mxu0 0.0
    %1077 = vmatpush1.msra.mxu0 0.0
    %1078 = vmatprep.subr.mxu0 0.0
    %1079 = vmatpush1.msra.mxu0 0.0
    %1080 = vmatprep.subr.mxu0 0.0
    %1081 = vmatpush1.msra.mxu0 0.0
    %1082 = vmatprep.subr.mxu0 0.0
    %1083 = vmatpush1.msra.mxu0 0.0
    %1084 = vmatprep.subr.mxu0 0.0
    %1085 = vmatpush1.msra.mxu0 0.0
    %1086 = vmatprep.subr.mxu0 0.0
    %1087 = vmatpush1.msra.mxu0 0.0
    %1088 = vmatprep.subr.mxu0 0.0
    %1089 = vmatpush1.msra.mxu0 0.0
    %1090 = vmatprep.subr.mxu0 0.0
    %1091 = vmatpush1.msra.mxu0 0.0
    %1092 = vmatprep.subr.mxu0 0.0
    %1093 = vmatpush1.msra.mxu0 0.0
    %1094 = vmatprep.subr.mxu0 0.0
    %1095 = vmatpush1.msra.mxu0 0.0
    %1096 = vmatprep.subr.mxu0 0.0
    %1097 = vmatpush1.msra.mxu0 0.0
    %1098 = vmatprep.subr.mxu0 0.0
    %1099 = vmatpush1.msra.mxu0 0.0
    %1100 = vmatprep.subr.mxu0 0.0
    %1101 = vmatpush1.msra.mxu0 0.0
    %1102 = vmatprep.subr.mxu0 0.0
    %1103 = vmatpush1.msra.mxu0 0.0
    %1104 = vmatprep.subr.mxu0 0.0
    %1105 = vmatpush1.msra.mxu0 0.0
    %1106 = vmatprep.subr.mxu0 0.0
    %1107 = vmatpush1.msra.mxu0 0.0
    %1108 = vmatprep.subr.mxu0 0.0
    %1109 = vmatpush1.msra.mxu0 0.0
    %1110 = vmatprep.subr.mxu0 0.0
    %1111 = vmatpush1.msra.mxu0 0.0
    %1112 = vmatprep.mubr.f32.mxu0 0.0
    %1113 = vmatmul.mubr.f32.gmra.mrb[0].mxu0 %v1046
    %v1114 = vpop.f32.mrb[0].mxu0
    %v1115 = vadd.f32 0.0, %v1114
    %v1116 = vpop.f32.mrb[0].mxu0
    %1117 = vdwg.mxu0
    %1118 = vrot.lane.b32.xlu0 %v184, 64
    %v1119 = vpop.permute.xlu0 %1118
    %v1122 = vsel %vm195, %v885, 0
    %1124 = vmatprep.subr.mxu0 0.0
    %1125 = vmatpush1.msra.mxu0 %v1119
    %1126 = vmatprep.subr.mxu0 0.0
    %1127 = vmatpush1.msra.mxu0 0.0
    %1128 = vmatprep.subr.mxu0 0.0
    %1129 = vmatpush1.msra.mxu0 0.0
    %1130 = vmatprep.subr.mxu0 0.0
    %1131 = vmatpush1.msra.mxu0 0.0
    %1132 = vmatprep.subr.mxu0 0.0
    %1133 = vmatpush1.msra.mxu0 0.0
    %1134 = vmatprep.subr.mxu0 0.0
    %1135 = vmatpush1.msra.mxu0 0.0
    %1136 = vmatprep.subr.mxu0 0.0
    %1137 = vmatpush1.msra.mxu0 0.0
    %1138 = vmatprep.subr.mxu0 0.0
    %1139 = vmatpush1.msra.mxu0 0.0
    %1140 = vmatprep.subr.mxu0 0.0
    %1141 = vmatpush1.msra.mxu0 0.0
    %1142 = vmatprep.subr.mxu0 0.0
    %1143 = vmatpush1.msra.mxu0 0.0
    %1144 = vmatprep.subr.mxu0 0.0
    %1145 = vmatpush1.msra.mxu0 0.0
    %1146 = vmatprep.subr.mxu0 0.0
    %1147 = vmatpush1.msra.mxu0 0.0
    %1148 = vmatprep.subr.mxu0 0.0
    %1149 = vmatpush1.msra.mxu0 0.0
    %1150 = vmatprep.subr.mxu0 0.0
    %1151 = vmatpush1.msra.mxu0 0.0
    %1152 = vmatprep.subr.mxu0 0.0
    %1153 = vmatpush1.msra.mxu0 0.0
    %1154 = vmatprep.subr.mxu0 0.0
    %1155 = vmatpush1.msra.mxu0 0.0
    %1156 = vmatprep.subr.mxu0 0.0
    %1157 = vmatpush1.msra.mxu0 0.0
    %1158 = vmatprep.subr.mxu0 0.0
    %1159 = vmatpush1.msra.mxu0 0.0
    %1160 = vmatprep.subr.mxu0 0.0
    %1161 = vmatpush1.msra.mxu0 0.0
    %1162 = vmatprep.subr.mxu0 0.0
    %1163 = vmatpush1.msra.mxu0 0.0
    %1164 = vmatprep.subr.mxu0 0.0
    %1165 = vmatpush1.msra.mxu0 0.0
    %1166 = vmatprep.subr.mxu0 0.0
    %1167 = vmatpush1.msra.mxu0 0.0
    %1168 = vmatprep.subr.mxu0 0.0
    %1169 = vmatpush1.msra.mxu0 0.0
    %1170 = vmatprep.subr.mxu0 0.0
    %1171 = vmatpush1.msra.mxu0 0.0
    %1172 = vmatprep.subr.mxu0 0.0
    %1173 = vmatpush1.msra.mxu0 0.0
    %1174 = vmatprep.subr.mxu0 0.0
    %1175 = vmatpush1.msra.mxu0 0.0
    %1176 = vmatprep.subr.mxu0 0.0
    %1177 = vmatpush1.msra.mxu0 0.0
    %1178 = vmatprep.subr.mxu0 0.0
    %1179 = vmatpush1.msra.mxu0 0.0
    %1180 = vmatprep.subr.mxu0 0.0
    %1181 = vmatpush1.msra.mxu0 0.0
    %1182 = vmatprep.subr.mxu0 0.0
    %1183 = vmatpush1.msra.mxu0 0.0
    %1184 = vmatprep.subr.mxu0 0.0
    %1185 = vmatpush1.msra.mxu0 0.0
    %1186 = vmatprep.subr.mxu0 0.0
    %1187 = vmatpush1.msra.mxu0 0.0
    %1188 = vmatprep.mubr.f32.mxu0 0.0
    %1189 = vmatmul.mubr.f32.gmra.mrb[0].mxu0 %v1122
    %v1190 = vpop.f32.mrb[0].mxu0
    %v1191 = vadd.f32 0.0, %v1190
    %v1192 = vpop.f32.mrb[0].mxu0
    %1193 = vdwg.mxu0
    %1194 = vrot.lane.b32.xlu0 %v186, 64
    %v1195 = vpop.permute.xlu0 %1194
    %v1198 = vsel %vm195, %v886, 0
    %1200 = vmatprep.subr.mxu0 0.0
    %1201 = vmatpush1.msra.mxu0 %v1195
    %1202 = vmatprep.subr.mxu0 0.0
    %1203 = vmatpush1.msra.mxu0 0.0
    %1204 = vmatprep.subr.mxu0 0.0
    %1205 = vmatpush1.msra.mxu0 0.0
    %1206 = vmatprep.subr.mxu0 0.0
    %1207 = vmatpush1.msra.mxu0 0.0
    %1208 = vmatprep.subr.mxu0 0.0
    %1209 = vmatpush1.msra.mxu0 0.0
    %1210 = vmatprep.subr.mxu0 0.0
    %1211 = vmatpush1.msra.mxu0 0.0
    %1212 = vmatprep.subr.mxu0 0.0
    %1213 = vmatpush1.msra.mxu0 0.0
    %1214 = vmatprep.subr.mxu0 0.0
    %1215 = vmatpush1.msra.mxu0 0.0
    %1216 = vmatprep.subr.mxu0 0.0
    %1217 = vmatpush1.msra.mxu0 0.0
    %1218 = vmatprep.subr.mxu0 0.0
    %1219 = vmatpush1.msra.mxu0 0.0
    %1220 = vmatprep.subr.mxu0 0.0
    %1221 = vmatpush1.msra.mxu0 0.0
    %1222 = vmatprep.subr.mxu0 0.0
    %1223 = vmatpush1.msra.mxu0 0.0
    %1224 = vmatprep.subr.mxu0 0.0
    %1225 = vmatpush1.msra.mxu0 0.0
    %1226 = vmatprep.subr.mxu0 0.0
    %1227 = vmatpush1.msra.mxu0 0.0
    %1228 = vmatprep.subr.mxu0 0.0
    %1229 = vmatpush1.msra.mxu0 0.0
    %1230 = vmatprep.subr.mxu0 0.0
    %1231 = vmatpush1.msra.mxu0 0.0
    %1232 = vmatprep.subr.mxu0 0.0
    %1233 = vmatpush1.msra.mxu0 0.0
    %1234 = vmatprep.subr.mxu0 0.0
    %1235 = vmatpush1.msra.mxu0 0.0
    %1236 = vmatprep.subr.mxu0 0.0
    %1237 = vmatpush1.msra.mxu0 0.0
    %1238 = vmatprep.subr.mxu0 0.0
    %1239 = vmatpush1.msra.mxu0 0.0
    %1240 = vmatprep.subr.mxu0 0.0
    %1241 = vmatpush1.msra.mxu0 0.0
    %1242 = vmatprep.subr.mxu0 0.0
    %1243 = vmatpush1.msra.mxu0 0.0
    %1244 = vmatprep.subr.mxu0 0.0
    %1245 = vmatpush1.msra.mxu0 0.0
    %1246 = vmatprep.subr.mxu0 0.0
    %1247 = vmatpush1.msra.mxu0 0.0
    %1248 = vmatprep.subr.mxu0 0.0
    %1249 = vmatpush1.msra.mxu0 0.0
    %1250 = vmatprep.subr.mxu0 0.0
    %1251 = vmatpush1.msra.mxu0 0.0
    %1252 = vmatprep.subr.mxu0 0.0
    %1253 = vmatpush1.msra.mxu0 0.0
    %1254 = vmatprep.subr.mxu0 0.0
    %1255 = vmatpush1.msra.mxu0 0.0
    %1256 = vmatprep.subr.mxu0 0.0
    %1257 = vmatpush1.msra.mxu0 0.0
    %1258 = vmatprep.subr.mxu0 0.0
    %1259 = vmatpush1.msra.mxu0 0.0
    %1260 = vmatprep.subr.mxu0 0.0
    %1261 = vmatpush1.msra.mxu0 0.0
    %1262 = vmatprep.subr.mxu0 0.0
    %1263 = vmatpush1.msra.mxu0 0.0
    %1264 = vmatprep.mubr.f32.mxu0 0.0
    %1265 = vmatmul.mubr.f32.gmra.mrb[0].mxu0 %v1198
    %v1266 = vpop.f32.mrb[0].mxu0
    %v1267 = vadd.f32 0.0, %v1266
    %v1268 = vpop.f32.mrb[0].mxu0
    %1269 = vdwg.mxu0
    %1270 = vrot.lane.b32.xlu0 %v188, 64
    %v1271 = vpop.permute.xlu0 %1270
    %v1274 = vsel %vm195, %v887, 0
    %1276 = vmatprep.subr.mxu0 0.0
    %1277 = vmatpush1.msra.mxu0 %v1271
    %1278 = vmatprep.subr.mxu0 0.0
    %1279 = vmatpush1.msra.mxu0 0.0
    %1280 = vmatprep.subr.mxu0 0.0
    %1281 = vmatpush1.msra.mxu0 0.0
    %1282 = vmatprep.subr.mxu0 0.0
    %1283 = vmatpush1.msra.mxu0 0.0
    %1284 = vmatprep.subr.mxu0 0.0
    %1285 = vmatpush1.msra.mxu0 0.0
    %1286 = vmatprep.subr.mxu0 0.0
    %1287 = vmatpush1.msra.mxu0 0.0
    %1288 = vmatprep.subr.mxu0 0.0
    %1289 = vmatpush1.msra.mxu0 0.0
    %1290 = vmatprep.subr.mxu0 0.0
    %1291 = vmatpush1.msra.mxu0 0.0
    %1292 = vmatprep.subr.mxu0 0.0
    %1293 = vmatpush1.msra.mxu0 0.0
    %1294 = vmatprep.subr.mxu0 0.0
    %1295 = vmatpush1.msra.mxu0 0.0
    %1296 = vmatprep.subr.mxu0 0.0
    %1297 = vmatpush1.msra.mxu0 0.0
    %1298 = vmatprep.subr.mxu0 0.0
    %1299 = vmatpush1.msra.mxu0 0.0
    %1300 = vmatprep.subr.mxu0 0.0
    %1301 = vmatpush1.msra.mxu0 0.0
    %1302 = vmatprep.subr.mxu0 0.0
    %1303 = vmatpush1.msra.mxu0 0.0
    %1304 = vmatprep.subr.mxu0 0.0
    %1305 = vmatpush1.msra.mxu0 0.0
    %1306 = vmatprep.subr.mxu0 0.0
    %1307 = vmatpush1.msra.mxu0 0.0
    %1308 = vmatprep.subr.mxu0 0.0
    %1309 = vmatpush1.msra.mxu0 0.0
    %1310 = vmatprep.subr.mxu0 0.0
    %1311 = vmatpush1.msra.mxu0 0.0
    %1312 = vmatprep.subr.mxu0 0.0
    %1313 = vmatpush1.msra.mxu0 0.0
    %1314 = vmatprep.subr.mxu0 0.0
    %1315 = vmatpush1.msra.mxu0 0.0
    %1316 = vmatprep.subr.mxu0 0.0
    %1317 = vmatpush1.msra.mxu0 0.0
    %1318 = vmatprep.subr.mxu0 0.0
    %1319 = vmatpush1.msra.mxu0 0.0
    %1320 = vmatprep.subr.mxu0 0.0
    %1321 = vmatpush1.msra.mxu0 0.0
    %1322 = vmatprep.subr.mxu0 0.0
    %1323 = vmatpush1.msra.mxu0 0.0
    %1324 = vmatprep.subr.mxu0 0.0
    %1325 = vmatpush1.msra.mxu0 0.0
    %1326 = vmatprep.subr.mxu0 0.0
    %1327 = vmatpush1.msra.mxu0 0.0
    %1328 = vmatprep.subr.mxu0 0.0
    %1329 = vmatpush1.msra.mxu0 0.0
    %1330 = vmatprep.subr.mxu0 0.0
    %1331 = vmatpush1.msra.mxu0 0.0
    %1332 = vmatprep.subr.mxu0 0.0
    %1333 = vmatpush1.msra.mxu0 0.0
    %1334 = vmatprep.subr.mxu0 0.0
    %1335 = vmatpush1.msra.mxu0 0.0
    %1336 = vmatprep.subr.mxu0 0.0
    %1337 = vmatpush1.msra.mxu0 0.0
    %1338 = vmatprep.subr.mxu0 0.0
    %1339 = vmatpush1.msra.mxu0 0.0
    %1340 = vmatprep.mubr.f32.mxu0 0.0
    %1341 = vmatmul.mubr.f32.gmra.mrb[0].mxu0 %v1274
    %v1342 = vpop.f32.mrb[0].mxu0
    %v1343 = vadd.f32 0.0, %v1342
    %v1344 = vpop.f32.mrb[0].mxu0
    %1345 = vdwg.mxu0
    %1346 = vrot.lane.b32.xlu0 %v190, 64
    %v1347 = vpop.permute.xlu0 %1346
    %v1350 = vsel %vm195, %v888, 0
    %1352 = vmatprep.subr.mxu0 0.0
    %1353 = vmatpush1.msra.mxu0 %v1347
    %1354 = vmatprep.subr.mxu0 0.0
    %1355 = vmatpush1.msra.mxu0 0.0
    %1356 = vmatprep.subr.mxu0 0.0
    %1357 = vmatpush1.msra.mxu0 0.0
    %1358 = vmatprep.subr.mxu0 0.0
    %1359 = vmatpush1.msra.mxu0 0.0
    %1360 = vmatprep.subr.mxu0 0.0
    %1361 = vmatpush1.msra.mxu0 0.0
    %1362 = vmatprep.subr.mxu0 0.0
    %1363 = vmatpush1.msra.mxu0 0.0
    %1364 = vmatprep.subr.mxu0 0.0
    %1365 = vmatpush1.msra.mxu0 0.0
    %1366 = vmatprep.subr.mxu0 0.0
    %1367 = vmatpush1.msra.mxu0 0.0
    %1368 = vmatprep.subr.mxu0 0.0
    %1369 = vmatpush1.msra.mxu0 0.0
    %1370 = vmatprep.subr.mxu0 0.0
    %1371 = vmatpush1.msra.mxu0 0.0
    %1372 = vmatprep.subr.mxu0 0.0
    %1373 = vmatpush1.msra.mxu0 0.0
    %1374 = vmatprep.subr.mxu0 0.0
    %1375 = vmatpush1.msra.mxu0 0.0
    %1376 = vmatprep.subr.mxu0 0.0
    %1377 = vmatpush1.msra.mxu0 0.0
    %1378 = vmatprep.subr.mxu0 0.0
    %1379 = vmatpush1.msra.mxu0 0.0
    %1380 = vmatprep.subr.mxu0 0.0
    %1381 = vmatpush1.msra.mxu0 0.0
    %1382 = vmatprep.subr.mxu0 0.0
    %1383 = vmatpush1.msra.mxu0 0.0
    %1384 = vmatprep.subr.mxu0 0.0
    %1385 = vmatpush1.msra.mxu0 0.0
    %1386 = vmatprep.subr.mxu0 0.0
    %1387 = vmatpush1.msra.mxu0 0.0
    %1388 = vmatprep.subr.mxu0 0.0
    %1389 = vmatpush1.msra.mxu0 0.0
    %1390 = vmatprep.subr.mxu0 0.0
    %1391 = vmatpush1.msra.mxu0 0.0
    %1392 = vmatprep.subr.mxu0 0.0
    %1393 = vmatpush1.msra.mxu0 0.0
    %1394 = vmatprep.subr.mxu0 0.0
    %1395 = vmatpush1.msra.mxu0 0.0
    %1396 = vmatprep.subr.mxu0 0.0
    %1397 = vmatpush1.msra.mxu0 0.0
    %1398 = vmatprep.subr.mxu0 0.0
    %1399 = vmatpush1.msra.mxu0 0.0
    %1400 = vmatprep.subr.mxu0 0.0
    %1401 = vmatpush1.msra.mxu0 0.0
    %1402 = vmatprep.subr.mxu0 0.0
    %1403 = vmatpush1.msra.mxu0 0.0
    %1404 = vmatprep.subr.mxu0 0.0
    %1405 = vmatpush1.msra.mxu0 0.0
    %1406 = vmatprep.subr.mxu0 0.0
    %1407 = vmatpush1.msra.mxu0 0.0
    %1408 = vmatprep.subr.mxu0 0.0
    %1409 = vmatpush1.msra.mxu0 0.0
    %1410 = vmatprep.subr.mxu0 0.0
    %1411 = vmatpush1.msra.mxu0 0.0
    %1412 = vmatprep.subr.mxu0 0.0
    %1413 = vmatpush1.msra.mxu0 0.0
    %1414 = vmatprep.subr.mxu0 0.0
    %1415 = vmatpush1.msra.mxu0 0.0
    %1416 = vmatprep.mubr.f32.mxu0 0.0
    %1417 = vmatmul.mubr.f32.gmra.mrb[0].mxu0 %v1350
    %v1418 = vpop.f32.mrb[0].mxu0
    %v1419 = vadd.f32 0.0, %v1418
    %v1420 = vpop.f32.mrb[0].mxu0
    %1421 = vdwg.mxu0
    %1422 = vrot.lane.b32.xlu0 %v192, 64
    %v1423 = vpop.permute.xlu0 %1422
    %v1426 = vsel %vm195, %v889, 0
    %1428 = vmatprep.subr.mxu0 0.0
    %1429 = vmatpush1.msra.mxu0 %v1423
    %1430 = vmatprep.subr.mxu0 0.0
    %1431 = vmatpush1.msra.mxu0 0.0
    %1432 = vmatprep.subr.mxu0 0.0
    %1433 = vmatpush1.msra.mxu0 0.0
    %1434 = vmatprep.subr.mxu0 0.0
    %1435 = vmatpush1.msra.mxu0 0.0
    %1436 = vmatprep.subr.mxu0 0.0
    %1437 = vmatpush1.msra.mxu0 0.0
    %1438 = vmatprep.subr.mxu0 0.0
    %1439 = vmatpush1.msra.mxu0 0.0
    %1440 = vmatprep.subr.mxu0 0.0
    %1441 = vmatpush1.msra.mxu0 0.0
    %1442 = vmatprep.subr.mxu0 0.0
    %1443 = vmatpush1.msra.mxu0 0.0
    %1444 = vmatprep.subr.mxu0 0.0
    %1445 = vmatpush1.msra.mxu0 0.0
    %1446 = vmatprep.subr.mxu0 0.0
    %1447 = vmatpush1.msra.mxu0 0.0
    %1448 = vmatprep.subr.mxu0 0.0
    %1449 = vmatpush1.msra.mxu0 0.0
    %1450 = vmatprep.subr.mxu0 0.0
    %1451 = vmatpush1.msra.mxu0 0.0
    %1452 = vmatprep.subr.mxu0 0.0
    %1453 = vmatpush1.msra.mxu0 0.0
    %1454 = vmatprep.subr.mxu0 0.0
    %1455 = vmatpush1.msra.mxu0 0.0
    %1456 = vmatprep.subr.mxu0 0.0
    %1457 = vmatpush1.msra.mxu0 0.0
    %1458 = vmatprep.subr.mxu0 0.0
    %1459 = vmatpush1.msra.mxu0 0.0
    %1460 = vmatprep.subr.mxu0 0.0
    %1461 = vmatpush1.msra.mxu0 0.0
    %1462 = vmatprep.subr.mxu0 0.0
    %1463 = vmatpush1.msra.mxu0 0.0
    %1464 = vmatprep.subr.mxu0 0.0
    %1465 = vmatpush1.msra.mxu0 0.0
    %1466 = vmatprep.subr.mxu0 0.0
    %1467 = vmatpush1.msra.mxu0 0.0
    %1468 = vmatprep.subr.mxu0 0.0
    %1469 = vmatpush1.msra.mxu0 0.0
    %1470 = vmatprep.subr.mxu0 0.0
    %1471 = vmatpush1.msra.mxu0 0.0
    %1472 = vmatprep.subr.mxu0 0.0
    %1473 = vmatpush1.msra.mxu0 0.0
    %1474 = vmatprep.subr.mxu0 0.0
    %1475 = vmatpush1.msra.mxu0 0.0
    %1476 = vmatprep.subr.mxu0 0.0
    %1477 = vmatpush1.msra.mxu0 0.0
    %1478 = vmatprep.subr.mxu0 0.0
    %1479 = vmatpush1.msra.mxu0 0.0
    %1480 = vmatprep.subr.mxu0 0.0
    %1481 = vmatpush1.msra.mxu0 0.0
    %1482 = vmatprep.subr.mxu0 0.0
    %1483 = vmatpush1.msra.mxu0 0.0
    %1484 = vmatprep.subr.mxu0 0.0
    %1485 = vmatpush1.msra.mxu0 0.0
    %1486 = vmatprep.subr.mxu0 0.0
    %1487 = vmatpush1.msra.mxu0 0.0
    %1488 = vmatprep.subr.mxu0 0.0
    %1489 = vmatpush1.msra.mxu0 0.0
    %1490 = vmatprep.subr.mxu0 0.0
    %1491 = vmatpush1.msra.mxu0 0.0
    %1492 = vmatprep.mubr.f32.mxu0 0.0
    %1493 = vmatmul.mubr.f32.gmra.mrb[0].mxu0 %v1426
    %v1494 = vpop.f32.mrb[0].mxu0
    %v1495 = vadd.f32 0.0, %v1494
    %v1496 = vpop.f32.mrb[0].mxu0
    %1497 = vdwg.mxu0
    %1500 = vrot.lane.b32.xlu0 %v1115, 8
    %v1501 = vpop.permute.xlu0 %1500
    %1502 = vrot.lane.b32.xlu0 %v1191, 8
    %v1503 = vpop.permute.xlu0 %1502
    %1508 = vrot.lane.b32.xlu0 %v1267, 16
    %v1509 = vpop.permute.xlu0 %1508
    %1510 = vrot.lane.b32.xlu0 %v1343, 16
    %v1511 = vpop.permute.xlu0 %1510
    %1516 = vrot.lane.b32.xlu0 %v1419, 24
    %v1517 = vpop.permute.xlu0 %1516
    %1518 = vrot.lane.b32.xlu0 %v1495, 24
    %v1519 = vpop.permute.xlu0 %1518
    %v1522 = vsel %vm195, %v963, %v1501
    %v1523 = vsel %vm195, %v1039, %v1503
    %vm1524 = vcmask 130048
    %v1525 = vsel %vm1524, %v1522, %v1509
    %v1526 = vsel %vm1524, %v1523, %v1511
    %vm1527 = vcmask 195584
    %v1528 = vsel %vm1527, %v1525, %v1517
    %v1529 = vsel %vm1527, %v1526, %v1519
    %1530 = vst.msk [vmem:[#allocation7] sm:$0xff] %vm48, %v1528
    %1531 = vst.msk [vmem:[#allocation7 + $0x8] sm:$0xff] %vm48, %v1529
    // Predicated region
    $region26: #{tpu_custom_call.1} parent=1 // pred_check
      _
    $region27: #{tpu_custom_call.1} parent=1 // pred_check_branch
      %1533 = sbr.rel (0) target = $region29
    $region28: #{tpu_custom_call.1} parent=1 // pred_region
      %s1535 = ssub.s32 256, 256
      %1536 = vsyncadd [#allocation4], %s1535
      %s1537 = sshll.u32 [#allocation7], 4
      %s1538 = int_to_ptr.vmem [resolvable:$true] %s1537
      %1543 = dma.vmem_to_hbm [thread:$0]  %s1538, 256, %s4, [#allocation4], 128, 128, 8
    $region29: #{tpu_custom_call.1} parent=1 // pred_fallthru
      _
    // Predicated region
    $region30: #{tpu_custom_call.1} parent=1 // pred_check
      _
    $region31: #{tpu_custom_call.1} parent=1 // pred_check_branch
      %1545 = sbr.rel (0) target = $region33
    $region32: #{tpu_custom_call.1} parent=1 // pred_region
      %1546 = dma.done [#allocation4], 256
    $region33: #{tpu_custom_call.1} parent=1 // pred_fallthru
      _
    %1547 = vsyncpa [#allocation3], 1
    %1548 = vsyncpa [#allocation6], 1
    %1549 = vsyncpa [#allocation4], 1

</llo_original>
